<compile_context>
chip_gen: v7x
topology: tpu7x:2x2x1
jax: 0.10.0
libtpu: 0.0.40
codegen_flags: <defaults>
</compile_context>

<pallas_src>
import math

import numpy as np
import jax
import jax.numpy as jnp
from jax import lax
from jax.experimental import pallas as pl
from jax.experimental.pallas import tpu as pltpu  # noqa: F401  (TPU backend assumed)

# ---- small, module-consistent shapes ----
B = 2            # batch
T = 16           # seq_len
D = 32           # embed_dim
H = 4            # attention heads
HD = D // H      # head_dim
F = 64           # ffn_embed_dim
RADIUS = 4       # local_radius
EPS = 1e-5       # LayerNorm eps (PyTorch default)
N = T * B        # fused rows: row r <-> (t = r // B, b = r % B)
HN = H * N       # head-packed lane width (= 128: one full lane tile)


def _layer_norm(v, g, b):
    mu = jnp.mean(v, axis=-1, keepdims=True)
    var = jnp.mean((v - mu) ** 2, axis=-1, keepdims=True)
    return (v - mu) * lax.rsqrt(var + EPS) * g + b


def spade_decoder_kernel(x_ref, wqkv_ref, bqkv_ref, wo_ref, w1_ref, b1_ref,
                         w2_ref, vec_ref, bias_ref, sel_ref, out_ref):
    # vec_ref rows: 0 ln1_g, 1 ln1_b, 2 ln2_g, 3 ln2_b, 4 bo, 5 b2
    x = x_ref[...]                                    # (N, D) fused (seq*batch) rows
    residual = x

    # --- self_attn_layer_norm (pre-LN) ---
    h = _layer_norm(x, vec_ref[0:1, :], vec_ref[1:2, :])

    # --- LocalAttention ---
    # fused QKV projection (one MXU matmul); 1/sqrt(head_dim) already folded
    # into Wq / bq at pack time.
    qkv = jnp.dot(h, wqkv_ref[...], preferred_element_type=jnp.float32) + bqkv_ref[...]
    q = qkv[:, 0:D]
    k = qkv[:, D:2 * D]
    v = qkv[:, 2 * D:3 * D]

    # All heads in one lane-dense MXU pass via block-diagonal (zero-padded)
    # operands.  sel[h*N + j, d] = 1 iff embedding column d belongs to head h.
    sel = sel_ref[...]                                              # (HN, D)
    k_bd = jnp.concatenate([k] * H, axis=0) * sel                   # (HN, D), row-block h = k_h
    v_bd = jnp.concatenate([v] * H, axis=0) * sel                   # (HN, D), row-block h = v_h

    # Scores for every head at once: contraction on the last dim of both
    # operands (no transpose materialized) -> (N, HN) = (32, 128), lane-dense.
    s = lax.dot_general(q, k_bd, dimension_numbers=(((1,), (1,)), ((), ())),
                        preferred_element_type=jnp.float32)
    # Precomputed band + same-batch mask, applied as an additive bias.
    s = s + bias_ref[...]

    # Per-head softmax on the head-blocked layout (static 32-lane block slices).
    # Every query row always has at least its diagonal key allowed (RADIUS>=0,
    # no padding rows), so no all-masked-row guard is needed.
    p_blocks = []
    for hh in range(H):
        sb = s[:, hh * N:(hh + 1) * N]
        sb = sb - jnp.max(sb, axis=-1, keepdims=True)
        eb = jnp.exp(sb)
        p_blocks.append(eb / jnp.sum(eb, axis=-1, keepdims=True))   # exact divide
    p = jnp.concatenate(p_blocks, axis=1)                           # (N, HN)

    # Context for all heads in one dot; the result is already head-concatenated
    # along lanes, so a single dot with Wo finishes the output projection.
    ctx = jnp.dot(p, v_bd, preferred_element_type=jnp.float32)      # (N, D)
    attn_out = jnp.dot(ctx, wo_ref[...],
                       preferred_element_type=jnp.float32) + vec_ref[4:5, :]

    # residual connection (dropout is identity in eval)
    x = residual + attn_out

    # --- FFN block ---
    residual = x
    h2 = _layer_norm(x, vec_ref[2:3, :], vec_ref[3:4, :])
    f = jnp.dot(h2, w1_ref[...], preferred_element_type=jnp.float32) + b1_ref[...]
    f = jnp.maximum(f, 0.0)                           # relu activation_fn
    f = jnp.dot(f, w2_ref[...], preferred_element_type=jnp.float32) + vec_ref[5:6, :]

    out_ref[...] = residual + f


def pack_params(p):
    """Fuse QKV (with the attention scale folded into Wq/bq) and pack the
    small D-wide vectors to cut input DMA count."""
    scale = 1.0 / math.sqrt(HD)
    return {
        "w_qkv": jnp.concatenate([p["wq"] * scale, p["wk"], p["wv"]], axis=1),  # (D, 3D)
        "b_qkv": jnp.concatenate([p["bq"] * scale, p["bk"], p["bv"]], axis=1),  # (1, 3D)
        "wo": p["wo"],                                                          # (D, D)
        "w1": p["w1"],                                                          # (D, F)
        "b1": p["b1"],                                                          # (1, F)
        "w2": p["w2"],                                                          # (F, D)
        "vecs": jnp.concatenate([p["ln1_g"], p["ln1_b"],
                                 p["ln2_g"], p["ln2_b"],
                                 p["bo"], p["b2"]], axis=0),                    # (6, D)
    }


def attention_constants():
    """Static additive band+same-batch mask (tiled per head block) and the
    head-block selector used to build the block-diagonal K/V operands."""
    r = np.arange(N)
    tq, bq_ = r // B, r % B
    allowed = ((bq_[:, None] == bq_[None, :]) &
               (tq[None, :] <= tq[:, None]) &
               ((tq[:, None] - tq[None, :]) <= RADIUS))              # (N, N)
    bias = np.where(allowed, 0.0, -1e30).astype(np.float32)
    bias = np.tile(bias, (1, H))                                     # (N, HN)
    row_head = np.arange(HN)[:, None] // N
    col_head = np.arange(D)[None, :] // HD
    sel = (row_head == col_head).astype(np.float32)                  # (HN, D)
    return jnp.asarray(bias), jnp.asarray(sel)


def spade_decoder_layer(x_tbd, packed, attn_bias, head_sel):
    """x_tbd: (seq_len, batch, embed_dim), as in the PyTorch forward."""
    # contiguous (free) view: row r <-> (t = r // B, b = r % B); no transposes
    xf = x_tbd.reshape(T * B, D)

    cost = pl.CostEstimate(flops=1_050_000, transcendentals=4_200,
                           bytes_accessed=92_000)

    out = pl.pallas_call(
        spade_decoder_kernel,
        out_shape=jax.ShapeDtypeStruct((T * B, D), jnp.float32),
        cost_estimate=cost,
    )(xf, packed["w_qkv"], packed["b_qkv"], packed["wo"],
      packed["w1"], packed["b1"], packed["w2"], packed["vecs"],
      attn_bias, head_sel)

    return out.reshape(T, B, D)


# ---------------- pure-JAX reference (same math, f32 matmuls) ----------------
def _dot(a, b):
    return jnp.dot(a, b, precision=lax.Precision.HIGHEST)


def _reference_single(x, p):          # x: (T, D) one batch element
    residual = x
    h = _layer_norm(x, p["ln1_g"], p["ln1_b"])
    q = _dot(h, p["wq"]) + p["bq"]
    k = _dot(h, p["wk"]) + p["bk"]
    v = _dot(h, p["wv"]) + p["bv"]
    qi = jnp.arange(T)[:, None]
    kj = jnp.arange(T)[None, :]
    allowed = (kj <= qi) & ((qi - kj) <= RADIUS)
    scale = 1.0 / math.sqrt(HD)
    outs = []
    for hh in range(H):
        qh = q[:, hh * HD:(hh + 1) * HD] * scale
        kh = k[:, hh * HD:(hh + 1) * HD]
        vh = v[:, hh * HD:(hh + 1) * HD]
        s = jnp.where(allowed, _dot(qh, kh.T), -1e30)
        p_attn = jax.nn.softmax(s, axis=-1)
        outs.append(_dot(p_attn, vh))
    ctx = jnp.concatenate(outs, axis=-1)
    x = residual + (_dot(ctx, p["wo"]) + p["bo"])
    residual = x
    h2 = _layer_norm(x, p["ln2_g"], p["ln2_b"])
    f = _dot(jnp.maximum(_dot(h2, p["w1"]) + p["b1"], 0.0), p["w2"]) + p["b2"]
    return residual + f


def reference(x_tbd, params):
    x_btd = jnp.transpose(x_tbd, (1, 0, 2))
    y = jax.vmap(lambda xb: _reference_single(xb, params))(x_btd)
    return jnp.transpose(y, (1, 0, 2))


def init_params(key):
    ks = jax.random.split(key, 8)
    s = 0.05
    return {
        "wq": jax.random.normal(ks[0], (D, D), jnp.float32) * s,
        "bq": jnp.zeros((1, D), jnp.float32),
        "wk": jax.random.normal(ks[1], (D, D), jnp.float32) * s,
        "bk": jnp.zeros((1, D), jnp.float32),
        "wv": jax.random.normal(ks[2], (D, D), jnp.float32) * s,
        "bv": jnp.zeros((1, D), jnp.float32),
        "wo": jax.random.normal(ks[3], (D, D), jnp.float32) * s,
        "bo": jax.random.normal(ks[4], (1, D), jnp.float32) * s,
        "ln1_g": jnp.ones((1, D), jnp.float32),
        "ln1_b": jnp.zeros((1, D), jnp.float32),
        "ln2_g": jnp.ones((1, D), jnp.float32),
        "ln2_b": jnp.zeros((1, D), jnp.float32),
        "w1": jax.random.normal(ks[5], (D, F), jnp.float32) * s,
        "b1": jax.random.normal(ks[6], (1, F), jnp.float32) * s,
        "w2": jax.random.normal(ks[7], (F, D), jnp.float32) * s,
        "b2": jnp.zeros((1, D), jnp.float32),
    }


if __name__ == "__main__":
    key = jax.random.PRNGKey(0)
    kx, kp = jax.random.split(key)
    x = jax.random.normal(kx, (T, B, D), jnp.float32)     # (seq, batch, embed)
    params = init_params(kp)
    packed = pack_params(params)
    attn_bias, head_sel = attention_constants()

    y = spade_decoder_layer(x, packed, attn_bias, head_sel)
    y = jax.block_until_ready(y)

    y_ref = reference(x, params)
    assert y.shape == (T, B, D)
    max_err = float(jnp.max(jnp.abs(y - y_ref)))
    # exact softmax normalization -> tight tolerance (only f32 reassociation)
    assert max_err < 5e-4, f"mismatch vs reference: max abs err {max_err}"

    print("KERNEL_OK")
</pallas_src>

<mosaic_0001>
module attributes {stable_mosaic.version = 11 : i64} {
  func.func @spade_decoder_kernel(%arg0: memref<32x32xf32, #tpu.memory_space<vmem>>, %arg1: memref<32x96xf32, #tpu.memory_space<vmem>>, %arg2: memref<1x96xf32, #tpu.memory_space<vmem>>, %arg3: memref<32x32xf32, #tpu.memory_space<vmem>>, %arg4: memref<32x64xf32, #tpu.memory_space<vmem>>, %arg5: memref<1x64xf32, #tpu.memory_space<vmem>>, %arg6: memref<64x32xf32, #tpu.memory_space<vmem>>, %arg7: memref<6x32xf32, #tpu.memory_space<vmem>>, %arg8: memref<32x128xf32, #tpu.memory_space<vmem>>, %arg9: memref<128x32xf32, #tpu.memory_space<vmem>>, %arg10: memref<32x32xf32, #tpu.memory_space<vmem>>) attributes {dimension_semantics = [], scalar_prefetch = 0 : i64, scratch_operands = 0 : i64, tpu.core_type = #tpu.core_type<tc>} {
    %c0 = arith.constant 0 : index
    %c0_0 = arith.constant 0 : index
    %0 = vector.load %arg0[%c0, %c0_0] : memref<32x32xf32, #tpu.memory_space<vmem>>, vector<32x32xf32>
    %c0_1 = arith.constant 0 : index
    %c0_2 = arith.constant 0 : index
    %1 = vector.load %arg7[%c0_1, %c0_2] : memref<6x32xf32, #tpu.memory_space<vmem>>, vector<1x32xf32>
    %c1 = arith.constant 1 : index
    %c0_3 = arith.constant 0 : index
    %2 = vector.load %arg7[%c1, %c0_3] : memref<6x32xf32, #tpu.memory_space<vmem>>, vector<1x32xf32>
    %cst = arith.constant dense<0.000000e+00> : vector<32xf32>
    %3 = vector.multi_reduction <add>, %0, %cst [1] : vector<32x32xf32> to vector<32xf32>
    %4 = vector.shape_cast %3 : vector<32xf32> to vector<32x1xf32>
    %cst_4 = arith.constant 3.200000e+01 : f32
    %5 = vector.broadcast %cst_4 : f32 to vector<32x1xf32>
    %6 = arith.divf %4, %5 : vector<32x1xf32>
    %7 = vector.broadcast %6 : vector<32x1xf32> to vector<32x32xf32>
    %8 = arith.subf %0, %7 : vector<32x32xf32>
    %9 = arith.mulf %8, %8 : vector<32x32xf32>
    %cst_5 = arith.constant dense<0.000000e+00> : vector<32xf32>
    %10 = vector.multi_reduction <add>, %9, %cst_5 [1] : vector<32x32xf32> to vector<32xf32>
    %11 = vector.shape_cast %10 : vector<32xf32> to vector<32x1xf32>
    %cst_6 = arith.constant 3.200000e+01 : f32
    %12 = vector.broadcast %cst_6 : f32 to vector<32x1xf32>
    %13 = arith.divf %11, %12 : vector<32x1xf32>
    %14 = vector.broadcast %6 : vector<32x1xf32> to vector<32x32xf32>
    %15 = arith.subf %0, %14 : vector<32x32xf32>
    %cst_7 = arith.constant 9.99999974E-6 : f32
    %16 = vector.broadcast %cst_7 : f32 to vector<32x1xf32>
    %17 = arith.addf %13, %16 : vector<32x1xf32>
    %18 = math.rsqrt %17 : vector<32x1xf32>
    %19 = vector.broadcast %18 : vector<32x1xf32> to vector<32x32xf32>
    %20 = arith.mulf %15, %19 : vector<32x32xf32>
    %21 = vector.broadcast %1 : vector<1x32xf32> to vector<32x32xf32>
    %22 = arith.mulf %20, %21 : vector<32x32xf32>
    %23 = vector.broadcast %2 : vector<1x32xf32> to vector<32x32xf32>
    %24 = arith.addf %22, %23 : vector<32x32xf32>
    %c0_8 = arith.constant 0 : index
    %c0_9 = arith.constant 0 : index
    %25 = vector.load %arg1[%c0_8, %c0_9] : memref<32x96xf32, #tpu.memory_space<vmem>>, vector<32x96xf32>
    %cst_10 = arith.constant dense<0.000000e+00> : vector<32x96xf32>
    %26 = tpu.matmul %24, %25, %cst_10 {dimension_numbers = #tpu.dot_dimension_numbers<[1], [0], [0], [1], [0, 0, 1, 1], [], []>} : vector<32x32xf32>, vector<32x96xf32>, vector<32x96xf32> -> vector<32x96xf32>
    %c0_11 = arith.constant 0 : index
    %c0_12 = arith.constant 0 : index
    %27 = vector.load %arg2[%c0_11, %c0_12] : memref<1x96xf32, #tpu.memory_space<vmem>>, vector<1x96xf32>
    %28 = vector.broadcast %27 : vector<1x96xf32> to vector<32x96xf32>
    %29 = arith.addf %26, %28 : vector<32x96xf32>
    %30 = vector.extract_strided_slice %29 {offsets = [0, 0], sizes = [32, 32], strides = [1, 1]} : vector<32x96xf32> to vector<32x32xf32>
    %31 = vector.extract_strided_slice %29 {offsets = [0, 32], sizes = [32, 32], strides = [1, 1]} : vector<32x96xf32> to vector<32x32xf32>
    %32 = vector.extract_strided_slice %29 {offsets = [0, 64], sizes = [32, 32], strides = [1, 1]} : vector<32x96xf32> to vector<32x32xf32>
    %c0_13 = arith.constant 0 : index
    %c0_14 = arith.constant 0 : index
    %33 = vector.load %arg9[%c0_13, %c0_14] : memref<128x32xf32, #tpu.memory_space<vmem>>, vector<128x32xf32>
    %34 = tpu.concatenate %31, %31, %31, %31 in 0 : vector<32x32xf32>, vector<32x32xf32>, vector<32x32xf32>, vector<32x32xf32> -> vector<128x32xf32>
    %35 = arith.mulf %34, %33 : vector<128x32xf32>
    %36 = tpu.concatenate %32, %32, %32, %32 in 0 : vector<32x32xf32>, vector<32x32xf32>, vector<32x32xf32>, vector<32x32xf32> -> vector<128x32xf32>
    %37 = arith.mulf %36, %33 : vector<128x32xf32>
    %cst_15 = arith.constant dense<0.000000e+00> : vector<32x128xf32>
    %38 = tpu.matmul %30, %35, %cst_15 {dimension_numbers = #tpu.dot_dimension_numbers<[1], [1], [0], [0], [0, 0, 1, 0], [], []>} : vector<32x32xf32>, vector<128x32xf32>, vector<32x128xf32> -> vector<32x128xf32>
    %c0_16 = arith.constant 0 : index
    %c0_17 = arith.constant 0 : index
    %39 = vector.load %arg8[%c0_16, %c0_17] : memref<32x128xf32, #tpu.memory_space<vmem>>, vector<32x128xf32>
    %40 = arith.addf %38, %39 : vector<32x128xf32>
    %41 = vector.extract_strided_slice %40 {offsets = [0, 0], sizes = [32, 32], strides = [1, 1]} : vector<32x128xf32> to vector<32x32xf32>
    %cst_18 = arith.constant dense<0xFF800000> : vector<32xf32>
    %42 = vector.multi_reduction <maximumf>, %41, %cst_18 [1] : vector<32x32xf32> to vector<32xf32>
    %43 = vector.shape_cast %42 : vector<32xf32> to vector<32x1xf32>
    %44 = vector.broadcast %43 : vector<32x1xf32> to vector<32x32xf32>
    %45 = arith.subf %41, %44 : vector<32x32xf32>
    %46 = math.exp %45 : vector<32x32xf32>
    %cst_19 = arith.constant dense<0.000000e+00> : vector<32xf32>
    %47 = vector.multi_reduction <add>, %46, %cst_19 [1] : vector<32x32xf32> to vector<32xf32>
    %48 = vector.shape_cast %47 : vector<32xf32> to vector<32x1xf32>
    %49 = vector.broadcast %48 : vector<32x1xf32> to vector<32x32xf32>
    %50 = arith.divf %46, %49 : vector<32x32xf32>
    %51 = vector.extract_strided_slice %40 {offsets = [0, 32], sizes = [32, 32], strides = [1, 1]} : vector<32x128xf32> to vector<32x32xf32>
    %cst_20 = arith.constant dense<0xFF800000> : vector<32xf32>
    %52 = vector.multi_reduction <maximumf>, %51, %cst_20 [1] : vector<32x32xf32> to vector<32xf32>
    %53 = vector.shape_cast %52 : vector<32xf32> to vector<32x1xf32>
    %54 = vector.broadcast %53 : vector<32x1xf32> to vector<32x32xf32>
    %55 = arith.subf %51, %54 : vector<32x32xf32>
    %56 = math.exp %55 : vector<32x32xf32>
    %cst_21 = arith.constant dense<0.000000e+00> : vector<32xf32>
    %57 = vector.multi_reduction <add>, %56, %cst_21 [1] : vector<32x32xf32> to vector<32xf32>
    %58 = vector.shape_cast %57 : vector<32xf32> to vector<32x1xf32>
    %59 = vector.broadcast %58 : vector<32x1xf32> to vector<32x32xf32>
    %60 = arith.divf %56, %59 : vector<32x32xf32>
    %61 = vector.extract_strided_slice %40 {offsets = [0, 64], sizes = [32, 32], strides = [1, 1]} : vector<32x128xf32> to vector<32x32xf32>
    %cst_22 = arith.constant dense<0xFF800000> : vector<32xf32>
    %62 = vector.multi_reduction <maximumf>, %61, %cst_22 [1] : vector<32x32xf32> to vector<32xf32>
    %63 = vector.shape_cast %62 : vector<32xf32> to vector<32x1xf32>
    %64 = vector.broadcast %63 : vector<32x1xf32> to vector<32x32xf32>
    %65 = arith.subf %61, %64 : vector<32x32xf32>
    %66 = math.exp %65 : vector<32x32xf32>
    %cst_23 = arith.constant dense<0.000000e+00> : vector<32xf32>
    %67 = vector.multi_reduction <add>, %66, %cst_23 [1] : vector<32x32xf32> to vector<32xf32>
    %68 = vector.shape_cast %67 : vector<32xf32> to vector<32x1xf32>
    %69 = vector.broadcast %68 : vector<32x1xf32> to vector<32x32xf32>
    %70 = arith.divf %66, %69 : vector<32x32xf32>
    %71 = vector.extract_strided_slice %40 {offsets = [0, 96], sizes = [32, 32], strides = [1, 1]} : vector<32x128xf32> to vector<32x32xf32>
    %cst_24 = arith.constant dense<0xFF800000> : vector<32xf32>
    %72 = vector.multi_reduction <maximumf>, %71, %cst_24 [1] : vector<32x32xf32> to vector<32xf32>
    %73 = vector.shape_cast %72 : vector<32xf32> to vector<32x1xf32>
    %74 = vector.broadcast %73 : vector<32x1xf32> to vector<32x32xf32>
    %75 = arith.subf %71, %74 : vector<32x32xf32>
    %76 = math.exp %75 : vector<32x32xf32>
    %cst_25 = arith.constant dense<0.000000e+00> : vector<32xf32>
    %77 = vector.multi_reduction <add>, %76, %cst_25 [1] : vector<32x32xf32> to vector<32xf32>
    %78 = vector.shape_cast %77 : vector<32xf32> to vector<32x1xf32>
    %79 = vector.broadcast %78 : vector<32x1xf32> to vector<32x32xf32>
    %80 = arith.divf %76, %79 : vector<32x32xf32>
    %81 = tpu.concatenate %50, %60, %70, %80 in 1 : vector<32x32xf32>, vector<32x32xf32>, vector<32x32xf32>, vector<32x32xf32> -> vector<32x128xf32>
    %cst_26 = arith.constant dense<0.000000e+00> : vector<32x32xf32>
    %82 = tpu.matmul %81, %37, %cst_26 {dimension_numbers = #tpu.dot_dimension_numbers<[1], [0], [0], [1], [0, 0, 1, 1], [], []>} : vector<32x128xf32>, vector<128x32xf32>, vector<32x32xf32> -> vector<32x32xf32>
    %c0_27 = arith.constant 0 : index
    %c0_28 = arith.constant 0 : index
    %83 = vector.load %arg3[%c0_27, %c0_28] : memref<32x32xf32, #tpu.memory_space<vmem>>, vector<32x32xf32>
    %cst_29 = arith.constant dense<0.000000e+00> : vector<32x32xf32>
    %84 = tpu.matmul %82, %83, %cst_29 {dimension_numbers = #tpu.dot_dimension_numbers<[1], [0], [0], [1], [0, 0, 1, 1], [], []>} : vector<32x32xf32>, vector<32x32xf32>, vector<32x32xf32> -> vector<32x32xf32>
    %c4 = arith.constant 4 : index
    %c0_30 = arith.constant 0 : index
    %85 = vector.load %arg7[%c4, %c0_30] : memref<6x32xf32, #tpu.memory_space<vmem>>, vector<1x32xf32>
    %86 = vector.broadcast %85 : vector<1x32xf32> to vector<32x32xf32>
    %87 = arith.addf %84, %86 : vector<32x32xf32>
    %88 = arith.addf %0, %87 : vector<32x32xf32>
    %c2 = arith.constant 2 : index
    %c0_31 = arith.constant 0 : index
    %89 = vector.load %arg7[%c2, %c0_31] : memref<6x32xf32, #tpu.memory_space<vmem>>, vector<1x32xf32>
    %c3 = arith.constant 3 : index
    %c0_32 = arith.constant 0 : index
    %90 = vector.load %arg7[%c3, %c0_32] : memref<6x32xf32, #tpu.memory_space<vmem>>, vector<1x32xf32>
    %cst_33 = arith.constant dense<0.000000e+00> : vector<32xf32>
    %91 = vector.multi_reduction <add>, %88, %cst_33 [1] : vector<32x32xf32> to vector<32xf32>
    %92 = vector.shape_cast %91 : vector<32xf32> to vector<32x1xf32>
    %cst_34 = arith.constant 3.200000e+01 : f32
    %93 = vector.broadcast %cst_34 : f32 to vector<32x1xf32>
    %94 = arith.divf %92, %93 : vector<32x1xf32>
    %95 = vector.broadcast %94 : vector<32x1xf32> to vector<32x32xf32>
    %96 = arith.subf %88, %95 : vector<32x32xf32>
    %97 = arith.mulf %96, %96 : vector<32x32xf32>
    %cst_35 = arith.constant dense<0.000000e+00> : vector<32xf32>
    %98 = vector.multi_reduction <add>, %97, %cst_35 [1] : vector<32x32xf32> to vector<32xf32>
    %99 = vector.shape_cast %98 : vector<32xf32> to vector<32x1xf32>
    %cst_36 = arith.constant 3.200000e+01 : f32
    %100 = vector.broadcast %cst_36 : f32 to vector<32x1xf32>
    %101 = arith.divf %99, %100 : vector<32x1xf32>
    %102 = vector.broadcast %94 : vector<32x1xf32> to vector<32x32xf32>
    %103 = arith.subf %88, %102 : vector<32x32xf32>
    %cst_37 = arith.constant 9.99999974E-6 : f32
    %104 = vector.broadcast %cst_37 : f32 to vector<32x1xf32>
    %105 = arith.addf %101, %104 : vector<32x1xf32>
    %106 = math.rsqrt %105 : vector<32x1xf32>
    %107 = vector.broadcast %106 : vector<32x1xf32> to vector<32x32xf32>
    %108 = arith.mulf %103, %107 : vector<32x32xf32>
    %109 = vector.broadcast %89 : vector<1x32xf32> to vector<32x32xf32>
    %110 = arith.mulf %108, %109 : vector<32x32xf32>
    %111 = vector.broadcast %90 : vector<1x32xf32> to vector<32x32xf32>
    %112 = arith.addf %110, %111 : vector<32x32xf32>
    %c0_38 = arith.constant 0 : index
    %c0_39 = arith.constant 0 : index
    %113 = vector.load %arg4[%c0_38, %c0_39] : memref<32x64xf32, #tpu.memory_space<vmem>>, vector<32x64xf32>
    %cst_40 = arith.constant dense<0.000000e+00> : vector<32x64xf32>
    %114 = tpu.matmul %112, %113, %cst_40 {dimension_numbers = #tpu.dot_dimension_numbers<[1], [0], [0], [1], [0, 0, 1, 1], [], []>} : vector<32x32xf32>, vector<32x64xf32>, vector<32x64xf32> -> vector<32x64xf32>
    %c0_41 = arith.constant 0 : index
    %c0_42 = arith.constant 0 : index
    %115 = vector.load %arg5[%c0_41, %c0_42] : memref<1x64xf32, #tpu.memory_space<vmem>>, vector<1x64xf32>
    %116 = vector.broadcast %115 : vector<1x64xf32> to vector<32x64xf32>
    %117 = arith.addf %114, %116 : vector<32x64xf32>
    %cst_43 = arith.constant 0.000000e+00 : f32
    %118 = vector.broadcast %cst_43 : f32 to vector<32x64xf32>
    %119 = arith.maximumf %117, %118 : vector<32x64xf32>
    %c0_44 = arith.constant 0 : index
    %c0_45 = arith.constant 0 : index
    %120 = vector.load %arg6[%c0_44, %c0_45] : memref<64x32xf32, #tpu.memory_space<vmem>>, vector<64x32xf32>
    %cst_46 = arith.constant dense<0.000000e+00> : vector<32x32xf32>
    %121 = tpu.matmul %119, %120, %cst_46 {dimension_numbers = #tpu.dot_dimension_numbers<[1], [0], [0], [1], [0, 0, 1, 1], [], []>} : vector<32x64xf32>, vector<64x32xf32>, vector<32x32xf32> -> vector<32x32xf32>
    %c5 = arith.constant 5 : index
    %c0_47 = arith.constant 0 : index
    %122 = vector.load %arg7[%c5, %c0_47] : memref<6x32xf32, #tpu.memory_space<vmem>>, vector<1x32xf32>
    %123 = vector.broadcast %122 : vector<1x32xf32> to vector<32x32xf32>
    %124 = arith.addf %121, %123 : vector<32x32xf32>
    %125 = arith.addf %88, %124 : vector<32x32xf32>
    %c0_48 = arith.constant 0 : index
    %c0_49 = arith.constant 0 : index
    %126 = vector.load %arg10[%c0_48, %c0_49] : memref<32x32xf32, #tpu.memory_space<vmem>>, vector<32x32xf32>
    tpu.vector_store %arg10[%c0_48, %c0_49], %125 {strides = array<i32>} : memref<32x32xf32, #tpu.memory_space<vmem>>, vector<32x32xf32>,
    return
  }
}

</mosaic_0001>

<llo_original>
// kernel: tpu_custom_call.1
$region0: #{tpu_custom_call.1}
  #allocation0 [shape = 'u32[]', space=smem, size = 0x4, offset = 0x4, fixed_abs, tag = 'smem constant byte address 0x4 - core index']
  #allocation1 [shape = 'u32[144,128]{1,0:T(1,128)}', space=vmem, size = 0x12000, scoped, tag = 'internal scratch']
  %s0 = inlined_call_operand.vmem [shape: f32[32,32], index: 0, kind: input, shape index: {}]
  %s1 = inlined_call_operand.vmem [shape: f32[32,96], index: 1, kind: input, shape index: {}]
  %s2 = inlined_call_operand.vmem [shape: f32[1,96], index: 2, kind: input, shape index: {}]
  %s3 = inlined_call_operand.vmem [shape: f32[32,32], index: 3, kind: input, shape index: {}]
  %s4 = inlined_call_operand.vmem [shape: f32[32,64], index: 4, kind: input, shape index: {}]
  %s5 = inlined_call_operand.vmem [shape: f32[1,64], index: 5, kind: input, shape index: {}]
  %s6 = inlined_call_operand.vmem [shape: f32[64,32], index: 6, kind: input, shape index: {}]
  %s7 = inlined_call_operand.vmem [shape: f32[6,32], index: 7, kind: input, shape index: {}]
  %s8 = inlined_call_operand.vmem [shape: f32[32,128], index: 8, kind: input, shape index: {}]
  %s9 = inlined_call_operand.vmem [shape: f32[128,32], index: 9, kind: input, shape index: {}]
  %s10 = inlined_call_operand.hbm [shape: f32[32,32], index: 10, kind: output, shape index: {}]
  %s11 = sld [smem:[#allocation0]]
  $region50: #{tpu_custom_call.1} parent=0
    _
  %s13 = ssub.s32 1, %s11
  %s14 = scalar_select 0, %s13, %s11
  $region1: #{tpu_custom_call.1} parent=0
    #allocation2 [shape = 'u8[16384]{0}', space=vmem, size = 0x4000, scoped, tag = 'output window, operand 0, single buffered']
    #allocation3 [shape = 's32[1]{0}', space=sflag, size = 0x4, scoped, tag = 'scoped memory for tpu_custom_call.1']
    %15 = vsyncpa [#allocation3], 0
    // Predicated region
    $region2: #{tpu_custom_call.1} parent=1 // pred_check
      _
    $region3: #{tpu_custom_call.1} parent=1 // pred_check_branch
      %17 = sbr.rel (0) target = $region5
    $region4: #{tpu_custom_call.1} parent=1 // pred_region
      _
    $region5: #{tpu_custom_call.1} parent=1 // pred_fallthru
      _
    // Predicated region
    $region6: #{tpu_custom_call.1} parent=1 // pred_check
      _
    $region7: #{tpu_custom_call.1} parent=1 // pred_check_branch
      %19 = sbr.rel (0) target = $region9
    $region8: #{tpu_custom_call.1} parent=1 // pred_region
      _
    $region9: #{tpu_custom_call.1} parent=1 // pred_fallthru
      _
    // Predicated region
    $region10: #{tpu_custom_call.1} parent=1 // pred_check
      _
    $region11: #{tpu_custom_call.1} parent=1 // pred_check_branch
      %21 = sbr.rel (0) target = $region13
    $region12: #{tpu_custom_call.1} parent=1 // pred_region
      _
    $region13: #{tpu_custom_call.1} parent=1 // pred_fallthru
      _
    // Predicated region
    $region14: #{tpu_custom_call.1} parent=1 // pred_check
      _
    $region15: #{tpu_custom_call.1} parent=1 // pred_check_branch
      %23 = sbr.rel (0) target = $region17
    $region16: #{tpu_custom_call.1} parent=1 // pred_region
      _
    $region17: #{tpu_custom_call.1} parent=1 // pred_fallthru
      _
    // Predicated region
    $region18: #{tpu_custom_call.1} parent=1 // pred_check
      _
    $region19: #{tpu_custom_call.1} parent=1 // pred_check_branch
      %25 = sbr.rel (0) target = $region21
    $region20: #{tpu_custom_call.1} parent=1 // pred_region
      _
    $region21: #{tpu_custom_call.1} parent=1 // pred_fallthru
      _
    // Predicated region
    $region22: #{tpu_custom_call.1} parent=1 // pred_check
      _
    $region23: #{tpu_custom_call.1} parent=1 // pred_check_branch
      %27 = sbr.rel (0) target = $region25
    $region24: #{tpu_custom_call.1} parent=1 // pred_region
      _
    $region25: #{tpu_custom_call.1} parent=1 // pred_fallthru
      _
    // Predicated region
    $region26: #{tpu_custom_call.1} parent=1 // pred_check
      _
    $region27: #{tpu_custom_call.1} parent=1 // pred_check_branch
      %29 = sbr.rel (0) target = $region29
    $region28: #{tpu_custom_call.1} parent=1 // pred_region
      _
    $region29: #{tpu_custom_call.1} parent=1 // pred_fallthru
      _
    // Predicated region
    $region30: #{tpu_custom_call.1} parent=1 // pred_check
      _
    $region31: #{tpu_custom_call.1} parent=1 // pred_check_branch
      %31 = sbr.rel (0) target = $region33
    $region32: #{tpu_custom_call.1} parent=1 // pred_region
      _
    $region33: #{tpu_custom_call.1} parent=1 // pred_fallthru
      _
    // Predicated region
    $region34: #{tpu_custom_call.1} parent=1 // pred_check
      _
    $region35: #{tpu_custom_call.1} parent=1 // pred_check_branch
      %33 = sbr.rel (0) target = $region37
    $region36: #{tpu_custom_call.1} parent=1 // pred_region
      _
    $region37: #{tpu_custom_call.1} parent=1 // pred_fallthru
      _
    // Predicated region
    $region38: #{tpu_custom_call.1} parent=1 // pred_check
      _
    $region39: #{tpu_custom_call.1} parent=1 // pred_check_branch
      %35 = sbr.rel (0) target = $region41
    $region40: #{tpu_custom_call.1} parent=1 // pred_region
      _
    $region41: #{tpu_custom_call.1} parent=1 // pred_fallthru
      _
    %v36 = vld [vmem:[%s0] sm:$0xff]
    %v37 = vld [vmem:[%s0 + $0x8] sm:$0xff]
    %v38 = vld [vmem:[%s0 + $0x10] sm:$0xff]
    %v39 = vld [vmem:[%s0 + $0x18] sm:$0xff]
    %v40 = vld [vmem:[%s7] sm:$0x1]
    %v41 = vld [vmem:[%s7 + $0x1] sm:$0x1]
    %vm42 = vcmask 261120
    %v43 = vsel %vm42, %v36, 0.0
    %44 = vadd.xlane.f32.xlu0 %v43
    %v45 = vpop.xlane.xlu0 %44
    %v46 = vsel %vm42, %v37, 0.0
    %47 = vadd.xlane.f32.xlu0 %v46
    %v48 = vpop.xlane.xlu0 %47
    %v49 = vsel %vm42, %v38, 0.0
    %50 = vadd.xlane.f32.xlu0 %v49
    %v51 = vpop.xlane.xlu0 %50
    %v52 = vsel %vm42, %v39, 0.0
    %53 = vadd.xlane.f32.xlu0 %v52
    %v54 = vpop.xlane.xlu0 %53
    %v55 = vrcp.pop 32.0
    %v56 = vmul.f32 %v45, %v55
    %v57 = vmul.f32 %v48, %v55
    %v58 = vmul.f32 %v51, %v55
    %v59 = vmul.f32 %v54, %v55
    %v60 = vsub.f32 %v36, %v56
    %v61 = vsub.f32 %v37, %v57
    %v62 = vsub.f32 %v38, %v58
    %v63 = vsub.f32 %v39, %v59
    %v64 = vmul.f32 %v60, %v60
    %v65 = vmul.f32 %v61, %v61
    %v66 = vmul.f32 %v62, %v62
    %v67 = vmul.f32 %v63, %v63
    %v68 = vsel %vm42, %v64, 0.0
    %69 = vadd.xlane.f32.xlu0 %v68
    %v70 = vpop.xlane.xlu0 %69
    %v71 = vsel %vm42, %v65, 0.0
    %72 = vadd.xlane.f32.xlu0 %v71
    %v73 = vpop.xlane.xlu0 %72
    %v74 = vsel %vm42, %v66, 0.0
    %75 = vadd.xlane.f32.xlu0 %v74
    %v76 = vpop.xlane.xlu0 %75
    %v77 = vsel %vm42, %v67, 0.0
    %78 = vadd.xlane.f32.xlu0 %v77
    %v79 = vpop.xlane.xlu0 %78
    %v80 = vmul.f32 %v70, %v55
    %v81 = vmul.f32 %v73, %v55
    %v82 = vmul.f32 %v76, %v55
    %v83 = vmul.f32 %v79, %v55
    %v84 = vadd.f32 %v80, 1e-05
    %v85 = vadd.f32 %v81, 1e-05
    %v86 = vadd.f32 %v82, 1e-05
    %v87 = vadd.f32 %v83, 1e-05
    %v88 = vrsqrt.pop %v84
    %v89 = vrsqrt.pop %v85
    %v90 = vrsqrt.pop %v86
    %v91 = vrsqrt.pop %v87
    %v92 = vmul.f32 %v60, %v88
    %v93 = vmul.f32 %v61, %v89
    %v94 = vmul.f32 %v62, %v90
    %v95 = vmul.f32 %v63, %v91
    %v96 = vlaneseq
    %v97 = vshrl.u32 %v96, 7
    %v98 = vsub.s32 0, %v97
    %v99 = vrot.slane %v40, %v98
    %v100 = vmul.f32 %v92, %v99
    %v101 = vmul.f32 %v93, %v99
    %v102 = vmul.f32 %v94, %v99
    %v103 = vmul.f32 %v95, %v99
    %v104 = vlaneseq
    %v105 = vshrl.u32 %v104, 7
    %v106 = vsub.s32 0, %v105
    %v107 = vrot.slane %v41, %v106
    %v108 = vadd.f32 %v100, %v107
    %v109 = vadd.f32 %v101, %v107
    %v110 = vadd.f32 %v102, %v107
    %v111 = vadd.f32 %v103, %v107
    %v112 = vld [vmem:[%s1] sm:$0xff]
    %v113 = vld [vmem:[%s1 + $0x8] sm:$0xff]
    %v114 = vld [vmem:[%s1 + $0x10] sm:$0xff]
    %v115 = vld [vmem:[%s1 + $0x18] sm:$0xff]
    %v116 = vld [vmem:[%s2] sm:$0x1]
    %v118 = vlaneseq
    %v119 = vshrl.u32 %v118, 7
    %v120 = vsub.s32 0, %v119
    %v121 = vrot.slane %v116, %v120
    %v124 = vsel %vm42, %v108, 0
    %v127 = vsel %vm42, %v109, 0
    %v130 = vsel %vm42, %v110, 0
    %v133 = vsel %vm42, %v111, 0
    %135 = vmatprep.subr.mxu0 0.0
    %136 = vmatpush1.msra.mxu0 %v112
    %137 = vmatprep.subr.mxu0 0.0
    %138 = vmatpush1.msra.mxu0 %v113
    %139 = vmatprep.subr.mxu0 0.0
    %140 = vmatpush1.msra.mxu0 %v114
    %141 = vmatprep.subr.mxu0 0.0
    %142 = vmatpush1.msra.mxu0 %v115
    %143 = vmatprep.subr.mxu0 0.0
    %144 = vmatpush1.msra.mxu0 0.0
    %145 = vmatprep.subr.mxu0 0.0
    %146 = vmatpush1.msra.mxu0 0.0
    %147 = vmatprep.subr.mxu0 0.0
    %148 = vmatpush1.msra.mxu0 0.0
    %149 = vmatprep.subr.mxu0 0.0
    %150 = vmatpush1.msra.mxu0 0.0
    %151 = vmatprep.subr.mxu0 0.0
    %152 = vmatpush1.msra.mxu0 0.0
    %153 = vmatprep.subr.mxu0 0.0
    %154 = vmatpush1.msra.mxu0 0.0
    %155 = vmatprep.subr.mxu0 0.0
    %156 = vmatpush1.msra.mxu0 0.0
    %157 = vmatprep.subr.mxu0 0.0
    %158 = vmatpush1.msra.mxu0 0.0
    %159 = vmatprep.subr.mxu0 0.0
    %160 = vmatpush1.msra.mxu0 0.0
    %161 = vmatprep.subr.mxu0 0.0
    %162 = vmatpush1.msra.mxu0 0.0
    %163 = vmatprep.subr.mxu0 0.0
    %164 = vmatpush1.msra.mxu0 0.0
    %165 = vmatprep.subr.mxu0 0.0
    %166 = vmatpush1.msra.mxu0 0.0
    %167 = vmatprep.subr.mxu0 0.0
    %168 = vmatpush1.msra.mxu0 0.0
    %169 = vmatprep.subr.mxu0 0.0
    %170 = vmatpush1.msra.mxu0 0.0
    %171 = vmatprep.subr.mxu0 0.0
    %172 = vmatpush1.msra.mxu0 0.0
    %173 = vmatprep.subr.mxu0 0.0
    %174 = vmatpush1.msra.mxu0 0.0
    %175 = vmatprep.subr.mxu0 0.0
    %176 = vmatpush1.msra.mxu0 0.0
    %177 = vmatprep.subr.mxu0 0.0
    %178 = vmatpush1.msra.mxu0 0.0
    %179 = vmatprep.subr.mxu0 0.0
    %180 = vmatpush1.msra.mxu0 0.0
    %181 = vmatprep.subr.mxu0 0.0
    %182 = vmatpush1.msra.mxu0 0.0
    %183 = vmatprep.subr.mxu0 0.0
    %184 = vmatpush1.msra.mxu0 0.0
    %185 = vmatprep.subr.mxu0 0.0
    %186 = vmatpush1.msra.mxu0 0.0
    %187 = vmatprep.subr.mxu0 0.0
    %188 = vmatpush1.msra.mxu0 0.0
    %189 = vmatprep.subr.mxu0 0.0
    %190 = vmatpush1.msra.mxu0 0.0
    %191 = vmatprep.subr.mxu0 0.0
    %192 = vmatpush1.msra.mxu0 0.0
    %193 = vmatprep.subr.mxu0 0.0
    %194 = vmatpush1.msra.mxu0 0.0
    %195 = vmatprep.subr.mxu0 0.0
    %196 = vmatpush1.msra.mxu0 0.0
    %197 = vmatprep.subr.mxu0 0.0
    %198 = vmatpush1.msra.mxu0 0.0
    %199 = vmatprep.mubr.f32.mxu0 0.0
    %200 = vmatmul.mubr.f32.gmra.mrb[0].mxu0 %v124
    %v201 = vpop.f32.mrb[0].mxu0
    %v202 = vadd.f32 %v121, %v201
    %v203 = vpop.f32.mrb[0].mxu0
    %204 = vmatprep.mubr.f32.mxu0 0.0
    %205 = vmatmul.mubr.f32.gmra.mrb[0].mxu0 %v127
    %v206 = vpop.f32.mrb[0].mxu0
    %v207 = vadd.f32 %v121, %v206
    %v208 = vpop.f32.mrb[0].mxu0
    %209 = vmatprep.mubr.f32.mxu0 0.0
    %210 = vmatmul.mubr.f32.gmra.mrb[0].mxu0 %v130
    %v211 = vpop.f32.mrb[0].mxu0
    %v212 = vadd.f32 %v121, %v211
    %v213 = vpop.f32.mrb[0].mxu0
    %214 = vmatprep.mubr.f32.mxu0 0.0
    %215 = vmatmul.mubr.f32.gmra.mrb[0].mxu0 %v133
    %v216 = vpop.f32.mrb[0].mxu0
    %v217 = vadd.f32 %v121, %v216
    %v218 = vpop.f32.mrb[0].mxu0
    %219 = vdwg.mxu0
    %v220 = vld [vmem:[%s9] sm:$0xff]
    %v221 = vld [vmem:[%s9 + $0x8] sm:$0xff]
    %v222 = vld [vmem:[%s9 + $0x10] sm:$0xff]
    %v223 = vld [vmem:[%s9 + $0x18] sm:$0xff]
    %v224 = vld [vmem:[%s9 + $0x20] sm:$0xff]
    %v225 = vld [vmem:[%s9 + $0x28] sm:$0xff]
    %v226 = vld [vmem:[%s9 + $0x30] sm:$0xff]
    %v227 = vld [vmem:[%s9 + $0x38] sm:$0xff]
    %v228 = vld [vmem:[%s9 + $0x40] sm:$0xff]
    %v229 = vld [vmem:[%s9 + $0x48] sm:$0xff]
    %v230 = vld [vmem:[%s9 + $0x50] sm:$0xff]
    %v231 = vld [vmem:[%s9 + $0x58] sm:$0xff]
    %v232 = vld [vmem:[%s9 + $0x60] sm:$0xff]
    %v233 = vld [vmem:[%s9 + $0x68] sm:$0xff]
    %v234 = vld [vmem:[%s9 + $0x70] sm:$0xff]
    %v235 = vld [vmem:[%s9 + $0x78] sm:$0xff]
    %252 = vrot.lane.b32.xlu0 %v220, 32
    %v253 = vpop.permute.xlu0 %252
    %254 = vrot.lane.b32.xlu0 %v221, 32
    %v255 = vpop.permute.xlu0 %254
    %256 = vrot.lane.b32.xlu0 %v222, 32
    %v257 = vpop.permute.xlu0 %256
    %258 = vrot.lane.b32.xlu0 %v223, 32
    %v259 = vpop.permute.xlu0 %258
    %260 = vrot.lane.b32.xlu0 %v224, 32
    %v261 = vpop.permute.xlu0 %260
    %262 = vrot.lane.b32.xlu0 %v225, 32
    %v263 = vpop.permute.xlu0 %262
    %264 = vrot.lane.b32.xlu0 %v226, 32
    %v265 = vpop.permute.xlu0 %264
    %266 = vrot.lane.b32.xlu0 %v227, 32
    %v267 = vpop.permute.xlu0 %266
    %268 = vrot.lane.b32.xlu0 %v228, 32
    %v269 = vpop.permute.xlu0 %268
    %270 = vrot.lane.b32.xlu0 %v229, 32
    %v271 = vpop.permute.xlu0 %270
    %272 = vrot.lane.b32.xlu0 %v230, 32
    %v273 = vpop.permute.xlu0 %272
    %274 = vrot.lane.b32.xlu0 %v231, 32
    %v275 = vpop.permute.xlu0 %274
    %276 = vrot.lane.b32.xlu0 %v232, 32
    %v277 = vpop.permute.xlu0 %276
    %278 = vrot.lane.b32.xlu0 %v233, 32
    %v279 = vpop.permute.xlu0 %278
    %280 = vrot.lane.b32.xlu0 %v234, 32
    %v281 = vpop.permute.xlu0 %280
    %282 = vrot.lane.b32.xlu0 %v235, 32
    %v283 = vpop.permute.xlu0 %282
    %v300 = vmul.f32 %v202, %v253
    %v301 = vmul.f32 %v207, %v255
    %v302 = vmul.f32 %v212, %v257
    %v303 = vmul.f32 %v217, %v259
    %v304 = vmul.f32 %v202, %v261
    %v305 = vmul.f32 %v207, %v263
    %v306 = vmul.f32 %v212, %v265
    %v307 = vmul.f32 %v217, %v267
    %v308 = vmul.f32 %v202, %v269
    %v309 = vmul.f32 %v207, %v271
    %v310 = vmul.f32 %v212, %v273
    %v311 = vmul.f32 %v217, %v275
    %v312 = vmul.f32 %v202, %v277
    %v313 = vmul.f32 %v207, %v279
    %v314 = vmul.f32 %v212, %v281
    %v315 = vmul.f32 %v217, %v283
    %316 = vrot.lane.b32.xlu0 %v220, 64
    %v317 = vpop.permute.xlu0 %316
    %318 = vrot.lane.b32.xlu0 %v221, 64
    %v319 = vpop.permute.xlu0 %318
    %320 = vrot.lane.b32.xlu0 %v222, 64
    %v321 = vpop.permute.xlu0 %320
    %322 = vrot.lane.b32.xlu0 %v223, 64
    %v323 = vpop.permute.xlu0 %322
    %324 = vrot.lane.b32.xlu0 %v224, 64
    %v325 = vpop.permute.xlu0 %324
    %326 = vrot.lane.b32.xlu0 %v225, 64
    %v327 = vpop.permute.xlu0 %326
    %328 = vrot.lane.b32.xlu0 %v226, 64
    %v329 = vpop.permute.xlu0 %328
    %330 = vrot.lane.b32.xlu0 %v227, 64
    %v331 = vpop.permute.xlu0 %330
    %332 = vrot.lane.b32.xlu0 %v228, 64
    %v333 = vpop.permute.xlu0 %332
    %334 = vrot.lane.b32.xlu0 %v229, 64
    %v335 = vpop.permute.xlu0 %334
    %336 = vrot.lane.b32.xlu0 %v230, 64
    %v337 = vpop.permute.xlu0 %336
    %338 = vrot.lane.b32.xlu0 %v231, 64
    %v339 = vpop.permute.xlu0 %338
    %340 = vrot.lane.b32.xlu0 %v232, 64
    %v341 = vpop.permute.xlu0 %340
    %342 = vrot.lane.b32.xlu0 %v233, 64
    %v343 = vpop.permute.xlu0 %342
    %344 = vrot.lane.b32.xlu0 %v234, 64
    %v345 = vpop.permute.xlu0 %344
    %346 = vrot.lane.b32.xlu0 %v235, 64
    %v347 = vpop.permute.xlu0 %346
    %v364 = vmul.f32 %v202, %v317
    %v365 = vmul.f32 %v207, %v319
    %v366 = vmul.f32 %v212, %v321
    %v367 = vmul.f32 %v217, %v323
    %v368 = vmul.f32 %v202, %v325
    %v369 = vmul.f32 %v207, %v327
    %v370 = vmul.f32 %v212, %v329
    %v371 = vmul.f32 %v217, %v331
    %v372 = vmul.f32 %v202, %v333
    %v373 = vmul.f32 %v207, %v335
    %v374 = vmul.f32 %v212, %v337
    %v375 = vmul.f32 %v217, %v339
    %v376 = vmul.f32 %v202, %v341
    %v377 = vmul.f32 %v207, %v343
    %v378 = vmul.f32 %v212, %v345
    %v379 = vmul.f32 %v217, %v347
    %v380 = vld [vmem:[%s8] sm:$0xff]
    %v381 = vld [vmem:[%s8 + $0x8] sm:$0xff]
    %v382 = vld [vmem:[%s8 + $0x10] sm:$0xff]
    %v383 = vld [vmem:[%s8 + $0x18] sm:$0xff]
    %400 = vrot.lane.b32.xlu0 %v300, 96
    %v401 = vpop.permute.xlu0 %400
    %402 = vrot.lane.b32.xlu0 %v301, 96
    %v403 = vpop.permute.xlu0 %402
    %404 = vrot.lane.b32.xlu0 %v302, 96
    %v405 = vpop.permute.xlu0 %404
    %406 = vrot.lane.b32.xlu0 %v303, 96
    %v407 = vpop.permute.xlu0 %406
    %408 = vrot.lane.b32.xlu0 %v304, 96
    %v409 = vpop.permute.xlu0 %408
    %410 = vrot.lane.b32.xlu0 %v305, 96
    %v411 = vpop.permute.xlu0 %410
    %412 = vrot.lane.b32.xlu0 %v306, 96
    %v413 = vpop.permute.xlu0 %412
    %414 = vrot.lane.b32.xlu0 %v307, 96
    %v415 = vpop.permute.xlu0 %414
    %416 = vrot.lane.b32.xlu0 %v308, 96
    %v417 = vpop.permute.xlu0 %416
    %418 = vrot.lane.b32.xlu0 %v309, 96
    %v419 = vpop.permute.xlu0 %418
    %420 = vrot.lane.b32.xlu0 %v310, 96
    %v421 = vpop.permute.xlu0 %420
    %422 = vrot.lane.b32.xlu0 %v311, 96
    %v423 = vpop.permute.xlu0 %422
    %424 = vrot.lane.b32.xlu0 %v312, 96
    %v425 = vpop.permute.xlu0 %424
    %426 = vrot.lane.b32.xlu0 %v313, 96
    %v427 = vpop.permute.xlu0 %426
    %428 = vrot.lane.b32.xlu0 %v314, 96
    %v429 = vpop.permute.xlu0 %428
    %430 = vrot.lane.b32.xlu0 %v315, 96
    %v431 = vpop.permute.xlu0 %430
    %v433 = vsel %vm42, %v202, 0
    %v436 = vsel %vm42, %v207, 0
    %v439 = vsel %vm42, %v212, 0
    %v442 = vsel %vm42, %v217, 0
    %v444 = vsel %vm42, %v401, 0
    %v446 = vsel %vm42, %v403, 0
    %v448 = vsel %vm42, %v405, 0
    %v450 = vsel %vm42, %v407, 0
    %v452 = vsel %vm42, %v409, 0
    %v454 = vsel %vm42, %v411, 0
    %v456 = vsel %vm42, %v413, 0
    %v458 = vsel %vm42, %v415, 0
    %v460 = vsel %vm42, %v417, 0
    %v462 = vsel %vm42, %v419, 0
    %v464 = vsel %vm42, %v421, 0
    %v466 = vsel %vm42, %v423, 0
    %v468 = vsel %vm42, %v425, 0
    %v470 = vsel %vm42, %v427, 0
    %v472 = vsel %vm42, %v429, 0
    %v474 = vsel %vm42, %v431, 0
    %476 = vmatprep.subr.mxu0 0.0
    %477 = vmatpush1.xpose.msra.mxu0 %v444
    %478 = vmatprep.subr.mxu0 0.0
    %479 = vmatpush1.xpose.msra.mxu0 %v446
    %480 = vmatprep.subr.mxu0 0.0
    %481 = vmatpush1.xpose.msra.mxu0 %v448
    %482 = vmatprep.subr.mxu0 0.0
    %483 = vmatpush1.xpose.msra.mxu0 %v450
    %484 = vmatprep.subr.mxu0 0.0
    %485 = vmatpush1.xpose.msra.mxu0 %v452
    %486 = vmatprep.subr.mxu0 0.0
    %487 = vmatpush1.xpose.msra.mxu0 %v454
    %488 = vmatprep.subr.mxu0 0.0
    %489 = vmatpush1.xpose.msra.mxu0 %v456
    %490 = vmatprep.subr.mxu0 0.0
    %491 = vmatpush1.xpose.msra.mxu0 %v458
    %492 = vmatprep.subr.mxu0 0.0
    %493 = vmatpush1.xpose.msra.mxu0 %v460
    %494 = vmatprep.subr.mxu0 0.0
    %495 = vmatpush1.xpose.msra.mxu0 %v462
    %496 = vmatprep.subr.mxu0 0.0
    %497 = vmatpush1.xpose.msra.mxu0 %v464
    %498 = vmatprep.subr.mxu0 0.0
    %499 = vmatpush1.xpose.msra.mxu0 %v466
    %500 = vmatprep.subr.mxu0 0.0
    %501 = vmatpush1.xpose.msra.mxu0 %v468
    %502 = vmatprep.subr.mxu0 0.0
    %503 = vmatpush1.xpose.msra.mxu0 %v470
    %504 = vmatprep.subr.mxu0 0.0
    %505 = vmatpush1.xpose.msra.mxu0 %v472
    %506 = vmatprep.subr.mxu0 0.0
    %507 = vmatpush1.xpose.msra.mxu0 %v474
    %508 = vmatprep.subr.mxu0 0.0
    %509 = vmatpush1.xpose.msra.mxu0 0.0
    %510 = vmatprep.subr.mxu0 0.0
    %511 = vmatpush1.xpose.msra.mxu0 0.0
    %512 = vmatprep.subr.mxu0 0.0
    %513 = vmatpush1.xpose.msra.mxu0 0.0
    %514 = vmatprep.subr.mxu0 0.0
    %515 = vmatpush1.xpose.msra.mxu0 0.0
    %516 = vmatprep.subr.mxu0 0.0
    %517 = vmatpush1.xpose.msra.mxu0 0.0
    %518 = vmatprep.subr.mxu0 0.0
    %519 = vmatpush1.xpose.msra.mxu0 0.0
    %520 = vmatprep.subr.mxu0 0.0
    %521 = vmatpush1.xpose.msra.mxu0 0.0
    %522 = vmatprep.subr.mxu0 0.0
    %523 = vmatpush1.xpose.msra.mxu0 0.0
    %524 = vmatprep.subr.mxu0 0.0
    %525 = vmatpush1.xpose.msra.mxu0 0.0
    %526 = vmatprep.subr.mxu0 0.0
    %527 = vmatpush1.xpose.msra.mxu0 0.0
    %528 = vmatprep.subr.mxu0 0.0
    %529 = vmatpush1.xpose.msra.mxu0 0.0
    %530 = vmatprep.subr.mxu0 0.0
    %531 = vmatpush1.xpose.msra.mxu0 0.0
    %532 = vmatprep.subr.mxu0 0.0
    %533 = vmatpush1.xpose.msra.mxu0 0.0
    %534 = vmatprep.subr.mxu0 0.0
    %535 = vmatpush1.xpose.msra.mxu0 0.0
    %536 = vmatprep.subr.mxu0 0.0
    %537 = vmatpush1.xpose.msra.mxu0 0.0
    %538 = vmatprep.subr.mxu0 0.0
    %539 = vmatpush1.xpose.msra.mxu0 0.0
    %540 = vmatprep.mubr.f32.mxu0 0.0
    %541 = vmatmul.mubr.f32.gmra.mrb[0].mxu0 %v433
    %v542 = vpop.f32.mrb[0].mxu0
    %v543 = vadd.f32 %v380, %v542
    %v544 = vpop.f32.mrb[0].mxu0
    %545 = vmatprep.mubr.f32.mxu0 0.0
    %546 = vmatmul.mubr.f32.gmra.mrb[0].mxu0 %v436
    %v547 = vpop.f32.mrb[0].mxu0
    %v548 = vadd.f32 %v381, %v547
    %v549 = vpop.f32.mrb[0].mxu0
    %550 = vmatprep.mubr.f32.mxu0 0.0
    %551 = vmatmul.mubr.f32.gmra.mrb[0].mxu0 %v439
    %v552 = vpop.f32.mrb[0].mxu0
    %v553 = vadd.f32 %v382, %v552
    %v554 = vpop.f32.mrb[0].mxu0
    %555 = vmatprep.mubr.f32.mxu0 0.0
    %556 = vmatmul.mubr.f32.gmra.mrb[0].mxu0 %v442
    %v557 = vpop.f32.mrb[0].mxu0
    %v558 = vadd.f32 %v383, %v557
    %v559 = vpop.f32.mrb[0].mxu0
    %560 = vdwg.mxu0
    %v561 = vsel %vm42, %v543, -inf
    %562 = vmax.xlane.f32.xlu0 %v561
    %v563 = vpop.xlane.xlu0 %562
    %v564 = vsel %vm42, %v548, -inf
    %565 = vmax.xlane.f32.xlu0 %v564
    %v566 = vpop.xlane.xlu0 %565
    %v567 = vsel %vm42, %v553, -inf
    %568 = vmax.xlane.f32.xlu0 %v567
    %v569 = vpop.xlane.xlu0 %568
    %v570 = vsel %vm42, %v558, -inf
    %571 = vmax.xlane.f32.xlu0 %v570
    %v572 = vpop.xlane.xlu0 %571
    %v573 = vsub.f32 %v543, %v563
    %v574 = vsub.f32 %v548, %v566
    %v575 = vsub.f32 %v553, %v569
    %v576 = vsub.f32 %v558, %v572
    %v577 = vmul.f32 %v573, 1.442695
    %v578 = vpow.pop %v577
    %v579 = vmul.f32 %v574, 1.442695
    %v580 = vpow.pop %v579
    %v581 = vmul.f32 %v575, 1.442695
    %v582 = vpow.pop %v581
    %v583 = vmul.f32 %v576, 1.442695
    %v584 = vpow.pop %v583
    %v585 = vsel %vm42, %v578, 0.0
    %586 = vadd.xlane.f32.xlu0 %v585
    %v587 = vpop.xlane.xlu0 %586
    %v588 = vsel %vm42, %v580, 0.0
    %589 = vadd.xlane.f32.xlu0 %v588
    %v590 = vpop.xlane.xlu0 %589
    %v591 = vsel %vm42, %v582, 0.0
    %592 = vadd.xlane.f32.xlu0 %v591
    %v593 = vpop.xlane.xlu0 %592
    %v594 = vsel %vm42, %v584, 0.0
    %595 = vadd.xlane.f32.xlu0 %v594
    %v596 = vpop.xlane.xlu0 %595
    %v597 = vrcp.pop %v587
    %v598 = vmul.f32 %v578, %v597
    %v599 = vrcp.pop %v590
    %v600 = vmul.f32 %v580, %v599
    %v601 = vrcp.pop %v593
    %v602 = vmul.f32 %v582, %v601
    %v603 = vrcp.pop %v596
    %v604 = vmul.f32 %v584, %v603
    %vm605 = vcmask 523520
    %v606 = vsel %vm605, %v543, -inf
    %607 = vmax.xlane.f32.xlu0 %v606
    %v608 = vpop.xlane.xlu0 %607
    %v609 = vsel %vm605, %v548, -inf
    %610 = vmax.xlane.f32.xlu0 %v609
    %v611 = vpop.xlane.xlu0 %610
    %v612 = vsel %vm605, %v553, -inf
    %613 = vmax.xlane.f32.xlu0 %v612
    %v614 = vpop.xlane.xlu0 %613
    %v615 = vsel %vm605, %v558, -inf
    %616 = vmax.xlane.f32.xlu0 %v615
    %v617 = vpop.xlane.xlu0 %616
    %v618 = vsub.f32 %v543, %v608
    %v619 = vsub.f32 %v548, %v611
    %v620 = vsub.f32 %v553, %v614
    %v621 = vsub.f32 %v558, %v617
    %v622 = vmul.f32 %v618, 1.442695
    %v623 = vpow.pop %v622
    %v624 = vmul.f32 %v619, 1.442695
    %v625 = vpow.pop %v624
    %v626 = vmul.f32 %v620, 1.442695
    %v627 = vpow.pop %v626
    %v628 = vmul.f32 %v621, 1.442695
    %v629 = vpow.pop %v628
    %634 = vrot.lane.b32.xlu0 %v623, 96
    %v635 = vpop.permute.xlu0 %634
    %636 = vrot.lane.b32.xlu0 %v625, 96
    %v637 = vpop.permute.xlu0 %636
    %638 = vrot.lane.b32.xlu0 %v627, 96
    %v639 = vpop.permute.xlu0 %638
    %640 = vrot.lane.b32.xlu0 %v629, 96
    %v641 = vpop.permute.xlu0 %640
    %v646 = vsel %vm42, %v635, 0.0
    %647 = vadd.xlane.f32.xlu0 %v646
    %v648 = vpop.xlane.xlu0 %647
    %v649 = vsel %vm42, %v637, 0.0
    %650 = vadd.xlane.f32.xlu0 %v649
    %v651 = vpop.xlane.xlu0 %650
    %v652 = vsel %vm42, %v639, 0.0
    %653 = vadd.xlane.f32.xlu0 %v652
    %v654 = vpop.xlane.xlu0 %653
    %v655 = vsel %vm42, %v641, 0.0
    %656 = vadd.xlane.f32.xlu0 %v655
    %v657 = vpop.xlane.xlu0 %656
    %v658 = vrcp.pop %v648
    %v659 = vmul.f32 %v623, %v658
    %v660 = vrcp.pop %v651
    %v661 = vmul.f32 %v625, %v660
    %v662 = vrcp.pop %v654
    %v663 = vmul.f32 %v627, %v662
    %v664 = vrcp.pop %v657
    %v665 = vmul.f32 %v629, %v664
    %vm666 = vcmask 785920
    %v667 = vsel %vm666, %v543, -inf
    %668 = vmax.xlane.f32.xlu0 %v667
    %v669 = vpop.xlane.xlu0 %668
    %v670 = vsel %vm666, %v548, -inf
    %671 = vmax.xlane.f32.xlu0 %v670
    %v672 = vpop.xlane.xlu0 %671
    %v673 = vsel %vm666, %v553, -inf
    %674 = vmax.xlane.f32.xlu0 %v673
    %v675 = vpop.xlane.xlu0 %674
    %v676 = vsel %vm666, %v558, -inf
    %677 = vmax.xlane.f32.xlu0 %v676
    %v678 = vpop.xlane.xlu0 %677
    %v679 = vsub.f32 %v543, %v669
    %v680 = vsub.f32 %v548, %v672
    %v681 = vsub.f32 %v553, %v675
    %v682 = vsub.f32 %v558, %v678
    %v683 = vmul.f32 %v679, 1.442695
    %v684 = vpow.pop %v683
    %v685 = vmul.f32 %v680, 1.442695
    %v686 = vpow.pop %v685
    %v687 = vmul.f32 %v681, 1.442695
    %v688 = vpow.pop %v687
    %v689 = vmul.f32 %v682, 1.442695
    %v690 = vpow.pop %v689
    %695 = vrot.lane.b32.xlu0 %v684, 64
    %v696 = vpop.permute.xlu0 %695
    %697 = vrot.lane.b32.xlu0 %v686, 64
    %v698 = vpop.permute.xlu0 %697
    %699 = vrot.lane.b32.xlu0 %v688, 64
    %v700 = vpop.permute.xlu0 %699
    %701 = vrot.lane.b32.xlu0 %v690, 64
    %v702 = vpop.permute.xlu0 %701
    %v707 = vsel %vm42, %v696, 0.0
    %708 = vadd.xlane.f32.xlu0 %v707
    %v709 = vpop.xlane.xlu0 %708
    %v710 = vsel %vm42, %v698, 0.0
    %711 = vadd.xlane.f32.xlu0 %v710
    %v712 = vpop.xlane.xlu0 %711
    %v713 = vsel %vm42, %v700, 0.0
    %714 = vadd.xlane.f32.xlu0 %v713
    %v715 = vpop.xlane.xlu0 %714
    %v716 = vsel %vm42, %v702, 0.0
    %717 = vadd.xlane.f32.xlu0 %v716
    %v718 = vpop.xlane.xlu0 %717
    %v719 = vrcp.pop %v709
    %v720 = vmul.f32 %v684, %v719
    %v721 = vrcp.pop %v712
    %v722 = vmul.f32 %v686, %v721
    %v723 = vrcp.pop %v715
    %v724 = vmul.f32 %v688, %v723
    %v725 = vrcp.pop %v718
    %v726 = vmul.f32 %v690, %v725
    %vm727 = vcmask 1048320
    %v728 = vsel %vm727, %v543, -inf
    %729 = vmax.xlane.f32.xlu0 %v728
    %v730 = vpop.xlane.xlu0 %729
    %v731 = vsel %vm727, %v548, -inf
    %732 = vmax.xlane.f32.xlu0 %v731
    %v733 = vpop.xlane.xlu0 %732
    %v734 = vsel %vm727, %v553, -inf
    %735 = vmax.xlane.f32.xlu0 %v734
    %v736 = vpop.xlane.xlu0 %735
    %v737 = vsel %vm727, %v558, -inf
    %738 = vmax.xlane.f32.xlu0 %v737
    %v739 = vpop.xlane.xlu0 %738
    %v740 = vsub.f32 %v543, %v730
    %v741 = vsub.f32 %v548, %v733
    %v742 = vsub.f32 %v553, %v736
    %v743 = vsub.f32 %v558, %v739
    %v744 = vmul.f32 %v740, 1.442695
    %v745 = vpow.pop %v744
    %v746 = vmul.f32 %v741, 1.442695
    %v747 = vpow.pop %v746
    %v748 = vmul.f32 %v742, 1.442695
    %v749 = vpow.pop %v748
    %v750 = vmul.f32 %v743, 1.442695
    %v751 = vpow.pop %v750
    %756 = vrot.lane.b32.xlu0 %v745, 32
    %v757 = vpop.permute.xlu0 %756
    %758 = vrot.lane.b32.xlu0 %v747, 32
    %v759 = vpop.permute.xlu0 %758
    %760 = vrot.lane.b32.xlu0 %v749, 32
    %v761 = vpop.permute.xlu0 %760
    %762 = vrot.lane.b32.xlu0 %v751, 32
    %v763 = vpop.permute.xlu0 %762
    %v768 = vsel %vm42, %v757, 0.0
    %769 = vadd.xlane.f32.xlu0 %v768
    %v770 = vpop.xlane.xlu0 %769
    %v771 = vsel %vm42, %v759, 0.0
    %772 = vadd.xlane.f32.xlu0 %v771
    %v773 = vpop.xlane.xlu0 %772
    %v774 = vsel %vm42, %v761, 0.0
    %775 = vadd.xlane.f32.xlu0 %v774
    %v776 = vpop.xlane.xlu0 %775
    %v777 = vsel %vm42, %v763, 0.0
    %778 = vadd.xlane.f32.xlu0 %v777
    %v779 = vpop.xlane.xlu0 %778
    %v780 = vrcp.pop %v770
    %v781 = vmul.f32 %v745, %v780
    %v782 = vrcp.pop %v773
    %v783 = vmul.f32 %v747, %v782
    %v784 = vrcp.pop %v776
    %v785 = vmul.f32 %v749, %v784
    %v786 = vrcp.pop %v779
    %v787 = vmul.f32 %v751, %v786
    %v788 = vsel %vm42, %v598, %v659
    %v789 = vsel %vm42, %v600, %v661
    %v790 = vsel %vm42, %v602, %v663
    %v791 = vsel %vm42, %v604, %v665
    %vm792 = vcmask 523264
    %v793 = vsel %vm792, %v788, %v720
    %v794 = vsel %vm792, %v789, %v722
    %v795 = vsel %vm792, %v790, %v724
    %v796 = vsel %vm792, %v791, %v726
    %vm797 = vcmask 785408
    %v798 = vsel %vm797, %v793, %v781
    %v799 = vsel %vm797, %v794, %v783
    %v800 = vsel %vm797, %v795, %v785
    %v801 = vsel %vm797, %v796, %v787
    %818 = vrot.lane.b32.xlu0 %v364, 64
    %v819 = vpop.permute.xlu0 %818
    %820 = vrot.lane.b32.xlu0 %v365, 64
    %v821 = vpop.permute.xlu0 %820
    %822 = vrot.lane.b32.xlu0 %v366, 64
    %v823 = vpop.permute.xlu0 %822
    %824 = vrot.lane.b32.xlu0 %v367, 64
    %v825 = vpop.permute.xlu0 %824
    %826 = vrot.lane.b32.xlu0 %v368, 64
    %v827 = vpop.permute.xlu0 %826
    %828 = vrot.lane.b32.xlu0 %v369, 64
    %v829 = vpop.permute.xlu0 %828
    %830 = vrot.lane.b32.xlu0 %v370, 64
    %v831 = vpop.permute.xlu0 %830
    %832 = vrot.lane.b32.xlu0 %v371, 64
    %v833 = vpop.permute.xlu0 %832
    %834 = vrot.lane.b32.xlu0 %v372, 64
    %v835 = vpop.permute.xlu0 %834
    %836 = vrot.lane.b32.xlu0 %v373, 64
    %v837 = vpop.permute.xlu0 %836
    %838 = vrot.lane.b32.xlu0 %v374, 64
    %v839 = vpop.permute.xlu0 %838
    %840 = vrot.lane.b32.xlu0 %v375, 64
    %v841 = vpop.permute.xlu0 %840
    %842 = vrot.lane.b32.xlu0 %v376, 64
    %v843 = vpop.permute.xlu0 %842
    %844 = vrot.lane.b32.xlu0 %v377, 64
    %v845 = vpop.permute.xlu0 %844
    %846 = vrot.lane.b32.xlu0 %v378, 64
    %v847 = vpop.permute.xlu0 %846
    %848 = vrot.lane.b32.xlu0 %v379, 64
    %v849 = vpop.permute.xlu0 %848
    %866 = vmatprep.subr.mxu0 0.0
    %867 = vmatpush1.msra.mxu0 %v819
    %868 = vmatprep.subr.mxu0 0.0
    %869 = vmatpush1.msra.mxu0 %v821
    %870 = vmatprep.subr.mxu0 0.0
    %871 = vmatpush1.msra.mxu0 %v823
    %872 = vmatprep.subr.mxu0 0.0
    %873 = vmatpush1.msra.mxu0 %v825
    %874 = vmatprep.subr.mxu0 0.0
    %875 = vmatpush1.msra.mxu0 %v827
    %876 = vmatprep.subr.mxu0 0.0
    %877 = vmatpush1.msra.mxu0 %v829
    %878 = vmatprep.subr.mxu0 0.0
    %879 = vmatpush1.msra.mxu0 %v831
    %880 = vmatprep.subr.mxu0 0.0
    %881 = vmatpush1.msra.mxu0 %v833
    %882 = vmatprep.subr.mxu0 0.0
    %883 = vmatpush1.msra.mxu0 %v835
    %884 = vmatprep.subr.mxu0 0.0
    %885 = vmatpush1.msra.mxu0 %v837
    %886 = vmatprep.subr.mxu0 0.0
    %887 = vmatpush1.msra.mxu0 %v839
    %888 = vmatprep.subr.mxu0 0.0
    %889 = vmatpush1.msra.mxu0 %v841
    %890 = vmatprep.subr.mxu0 0.0
    %891 = vmatpush1.msra.mxu0 %v843
    %892 = vmatprep.subr.mxu0 0.0
    %893 = vmatpush1.msra.mxu0 %v845
    %894 = vmatprep.subr.mxu0 0.0
    %895 = vmatpush1.msra.mxu0 %v847
    %896 = vmatprep.subr.mxu0 0.0
    %897 = vmatpush1.msra.mxu0 %v849
    %898 = vmatprep.subr.mxu0 0.0
    %899 = vmatpush1.msra.mxu0 0.0
    %900 = vmatprep.subr.mxu0 0.0
    %901 = vmatpush1.msra.mxu0 0.0
    %902 = vmatprep.subr.mxu0 0.0
    %903 = vmatpush1.msra.mxu0 0.0
    %904 = vmatprep.subr.mxu0 0.0
    %905 = vmatpush1.msra.mxu0 0.0
    %906 = vmatprep.subr.mxu0 0.0
    %907 = vmatpush1.msra.mxu0 0.0
    %908 = vmatprep.subr.mxu0 0.0
    %909 = vmatpush1.msra.mxu0 0.0
    %910 = vmatprep.subr.mxu0 0.0
    %911 = vmatpush1.msra.mxu0 0.0
    %912 = vmatprep.subr.mxu0 0.0
    %913 = vmatpush1.msra.mxu0 0.0
    %914 = vmatprep.subr.mxu0 0.0
    %915 = vmatpush1.msra.mxu0 0.0
    %916 = vmatprep.subr.mxu0 0.0
    %917 = vmatpush1.msra.mxu0 0.0
    %918 = vmatprep.subr.mxu0 0.0
    %919 = vmatpush1.msra.mxu0 0.0
    %920 = vmatprep.subr.mxu0 0.0
    %921 = vmatpush1.msra.mxu0 0.0
    %922 = vmatprep.subr.mxu0 0.0
    %923 = vmatpush1.msra.mxu0 0.0
    %924 = vmatprep.subr.mxu0 0.0
    %925 = vmatpush1.msra.mxu0 0.0
    %926 = vmatprep.subr.mxu0 0.0
    %927 = vmatpush1.msra.mxu0 0.0
    %928 = vmatprep.subr.mxu0 0.0
    %929 = vmatpush1.msra.mxu0 0.0
    %930 = vmatprep.mubr.f32.mxu0 0.0
    %931 = vmatmul.mubr.f32.gmra.mrb[0].mxu0 %v798
    %v932 = vpop.f32.mrb[0].mxu0
    %v933 = vadd.f32 0.0, %v932
    %v934 = vpop.f32.mrb[0].mxu0
    %935 = vmatprep.mubr.f32.mxu0 0.0
    %936 = vmatmul.mubr.f32.gmra.mrb[0].mxu0 %v799
    %v937 = vpop.f32.mrb[0].mxu0
    %v938 = vadd.f32 0.0, %v937
    %v939 = vpop.f32.mrb[0].mxu0
    %940 = vmatprep.mubr.f32.mxu0 0.0
    %941 = vmatmul.mubr.f32.gmra.mrb[0].mxu0 %v800
    %v942 = vpop.f32.mrb[0].mxu0
    %v943 = vadd.f32 0.0, %v942
    %v944 = vpop.f32.mrb[0].mxu0
    %945 = vmatprep.mubr.f32.mxu0 0.0
    %946 = vmatmul.mubr.f32.gmra.mrb[0].mxu0 %v801
    %v947 = vpop.f32.mrb[0].mxu0
    %v948 = vadd.f32 0.0, %v947
    %v949 = vpop.f32.mrb[0].mxu0
    %950 = vdwg.mxu0
    %v951 = vld [vmem:[%s3] sm:$0xff]
    %v952 = vld [vmem:[%s3 + $0x8] sm:$0xff]
    %v953 = vld [vmem:[%s3 + $0x10] sm:$0xff]
    %v954 = vld [vmem:[%s3 + $0x18] sm:$0xff]
    %v955 = vld [vmem:[%s7 + $0x4] sm:$0x1]
    %v956 = vlaneseq
    %v957 = vshrl.u32 %v956, 7
    %v958 = vsub.s32 0, %v957
    %v959 = vrot.slane %v955, %v958
    %v961 = vsel %vm42, %v933, 0
    %v964 = vsel %vm42, %v938, 0
    %v967 = vsel %vm42, %v943, 0
    %v970 = vsel %vm42, %v948, 0
    %972 = vmatprep.subr.mxu0 0.0
    %973 = vmatpush1.msra.mxu0 %v951
    %974 = vmatprep.subr.mxu0 0.0
    %975 = vmatpush1.msra.mxu0 %v952
    %976 = vmatprep.subr.mxu0 0.0
    %977 = vmatpush1.msra.mxu0 %v953
    %978 = vmatprep.subr.mxu0 0.0
    %979 = vmatpush1.msra.mxu0 %v954
    %980 = vmatprep.subr.mxu0 0.0
    %981 = vmatpush1.msra.mxu0 0.0
    %982 = vmatprep.subr.mxu0 0.0
    %983 = vmatpush1.msra.mxu0 0.0
    %984 = vmatprep.subr.mxu0 0.0
    %985 = vmatpush1.msra.mxu0 0.0
    %986 = vmatprep.subr.mxu0 0.0
    %987 = vmatpush1.msra.mxu0 0.0
    %988 = vmatprep.subr.mxu0 0.0
    %989 = vmatpush1.msra.mxu0 0.0
    %990 = vmatprep.subr.mxu0 0.0
    %991 = vmatpush1.msra.mxu0 0.0
    %992 = vmatprep.subr.mxu0 0.0
    %993 = vmatpush1.msra.mxu0 0.0
    %994 = vmatprep.subr.mxu0 0.0
    %995 = vmatpush1.msra.mxu0 0.0
    %996 = vmatprep.subr.mxu0 0.0
    %997 = vmatpush1.msra.mxu0 0.0
    %998 = vmatprep.subr.mxu0 0.0
    %999 = vmatpush1.msra.mxu0 0.0
    %1000 = vmatprep.subr.mxu0 0.0
    %1001 = vmatpush1.msra.mxu0 0.0
    %1002 = vmatprep.subr.mxu0 0.0
    %1003 = vmatpush1.msra.mxu0 0.0
    %1004 = vmatprep.subr.mxu0 0.0
    %1005 = vmatpush1.msra.mxu0 0.0
    %1006 = vmatprep.subr.mxu0 0.0
    %1007 = vmatpush1.msra.mxu0 0.0
    %1008 = vmatprep.subr.mxu0 0.0
    %1009 = vmatpush1.msra.mxu0 0.0
    %1010 = vmatprep.subr.mxu0 0.0
    %1011 = vmatpush1.msra.mxu0 0.0
    %1012 = vmatprep.subr.mxu0 0.0
    %1013 = vmatpush1.msra.mxu0 0.0
    %1014 = vmatprep.subr.mxu0 0.0
    %1015 = vmatpush1.msra.mxu0 0.0
    %1016 = vmatprep.subr.mxu0 0.0
    %1017 = vmatpush1.msra.mxu0 0.0
    %1018 = vmatprep.subr.mxu0 0.0
    %1019 = vmatpush1.msra.mxu0 0.0
    %1020 = vmatprep.subr.mxu0 0.0
    %1021 = vmatpush1.msra.mxu0 0.0
    %1022 = vmatprep.subr.mxu0 0.0
    %1023 = vmatpush1.msra.mxu0 0.0
    %1024 = vmatprep.subr.mxu0 0.0
    %1025 = vmatpush1.msra.mxu0 0.0
    %1026 = vmatprep.subr.mxu0 0.0
    %1027 = vmatpush1.msra.mxu0 0.0
    %1028 = vmatprep.subr.mxu0 0.0
    %1029 = vmatpush1.msra.mxu0 0.0
    %1030 = vmatprep.subr.mxu0 0.0
    %1031 = vmatpush1.msra.mxu0 0.0
    %1032 = vmatprep.subr.mxu0 0.0
    %1033 = vmatpush1.msra.mxu0 0.0
    %1034 = vmatprep.subr.mxu0 0.0
    %1035 = vmatpush1.msra.mxu0 0.0
    %1036 = vmatprep.mubr.f32.mxu0 0.0
    %1037 = vmatmul.mubr.f32.gmra.mrb[0].mxu0 %v961
    %v1038 = vpop.f32.mrb[0].mxu0
    %v1039 = vadd.f32 %v959, %v1038
    %v1040 = vpop.f32.mrb[0].mxu0
    %1041 = vmatprep.mubr.f32.mxu0 0.0
    %1042 = vmatmul.mubr.f32.gmra.mrb[0].mxu0 %v964
    %v1043 = vpop.f32.mrb[0].mxu0
    %v1044 = vadd.f32 %v959, %v1043
    %v1045 = vpop.f32.mrb[0].mxu0
    %1046 = vmatprep.mubr.f32.mxu0 0.0
    %1047 = vmatmul.mubr.f32.gmra.mrb[0].mxu0 %v967
    %v1048 = vpop.f32.mrb[0].mxu0
    %v1049 = vadd.f32 %v959, %v1048
    %v1050 = vpop.f32.mrb[0].mxu0
    %1051 = vmatprep.mubr.f32.mxu0 0.0
    %1052 = vmatmul.mubr.f32.gmra.mrb[0].mxu0 %v970
    %v1053 = vpop.f32.mrb[0].mxu0
    %v1054 = vadd.f32 %v959, %v1053
    %v1055 = vpop.f32.mrb[0].mxu0
    %1056 = vdwg.mxu0
    %v1057 = vadd.f32 %v36, %v1039
    %v1058 = vadd.f32 %v37, %v1044
    %v1059 = vadd.f32 %v38, %v1049
    %v1060 = vadd.f32 %v39, %v1054
    %v1061 = vld [vmem:[%s7 + $0x2] sm:$0x1]
    %v1062 = vld [vmem:[%s7 + $0x3] sm:$0x1]
    %v1063 = vsel %vm42, %v1057, 0.0
    %1064 = vadd.xlane.f32.xlu0 %v1063
    %v1065 = vpop.xlane.xlu0 %1064
    %v1066 = vsel %vm42, %v1058, 0.0
    %1067 = vadd.xlane.f32.xlu0 %v1066
    %v1068 = vpop.xlane.xlu0 %1067
    %v1069 = vsel %vm42, %v1059, 0.0
    %1070 = vadd.xlane.f32.xlu0 %v1069
    %v1071 = vpop.xlane.xlu0 %1070
    %v1072 = vsel %vm42, %v1060, 0.0
    %1073 = vadd.xlane.f32.xlu0 %v1072
    %v1074 = vpop.xlane.xlu0 %1073
    %v1075 = vmul.f32 %v1065, %v55
    %v1076 = vmul.f32 %v1068, %v55
    %v1077 = vmul.f32 %v1071, %v55
    %v1078 = vmul.f32 %v1074, %v55
    %v1079 = vsub.f32 %v1057, %v1075
    %v1080 = vsub.f32 %v1058, %v1076
    %v1081 = vsub.f32 %v1059, %v1077
    %v1082 = vsub.f32 %v1060, %v1078
    %v1083 = vmul.f32 %v1079, %v1079
    %v1084 = vmul.f32 %v1080, %v1080
    %v1085 = vmul.f32 %v1081, %v1081
    %v1086 = vmul.f32 %v1082, %v1082
    %v1087 = vsel %vm42, %v1083, 0.0
    %1088 = vadd.xlane.f32.xlu0 %v1087
    %v1089 = vpop.xlane.xlu0 %1088
    %v1090 = vsel %vm42, %v1084, 0.0
    %1091 = vadd.xlane.f32.xlu0 %v1090
    %v1092 = vpop.xlane.xlu0 %1091
    %v1093 = vsel %vm42, %v1085, 0.0
    %1094 = vadd.xlane.f32.xlu0 %v1093
    %v1095 = vpop.xlane.xlu0 %1094
    %v1096 = vsel %vm42, %v1086, 0.0
    %1097 = vadd.xlane.f32.xlu0 %v1096
    %v1098 = vpop.xlane.xlu0 %1097
    %v1099 = vmul.f32 %v1089, %v55
    %v1100 = vmul.f32 %v1092, %v55
    %v1101 = vmul.f32 %v1095, %v55
    %v1102 = vmul.f32 %v1098, %v55
    %v1103 = vadd.f32 %v1099, 1e-05
    %v1104 = vadd.f32 %v1100, 1e-05
    %v1105 = vadd.f32 %v1101, 1e-05
    %v1106 = vadd.f32 %v1102, 1e-05
    %v1107 = vrsqrt.pop %v1103
    %v1108 = vrsqrt.pop %v1104
    %v1109 = vrsqrt.pop %v1105
    %v1110 = vrsqrt.pop %v1106
    %v1111 = vmul.f32 %v1079, %v1107
    %v1112 = vmul.f32 %v1080, %v1108
    %v1113 = vmul.f32 %v1081, %v1109
    %v1114 = vmul.f32 %v1082, %v1110
    %v1115 = vlaneseq
    %v1116 = vshrl.u32 %v1115, 7
    %v1117 = vsub.s32 0, %v1116
    %v1118 = vrot.slane %v1061, %v1117
    %v1119 = vmul.f32 %v1111, %v1118
    %v1120 = vmul.f32 %v1112, %v1118
    %v1121 = vmul.f32 %v1113, %v1118
    %v1122 = vmul.f32 %v1114, %v1118
    %v1123 = vlaneseq
    %v1124 = vshrl.u32 %v1123, 7
    %v1125 = vsub.s32 0, %v1124
    %v1126 = vrot.slane %v1062, %v1125
    %v1127 = vadd.f32 %v1119, %v1126
    %v1128 = vadd.f32 %v1120, %v1126
    %v1129 = vadd.f32 %v1121, %v1126
    %v1130 = vadd.f32 %v1122, %v1126
    %v1131 = vld [vmem:[%s4] sm:$0xff]
    %v1132 = vld [vmem:[%s4 + $0x8] sm:$0xff]
    %v1133 = vld [vmem:[%s4 + $0x10] sm:$0xff]
    %v1134 = vld [vmem:[%s4 + $0x18] sm:$0xff]
    %v1135 = vld [vmem:[%s5] sm:$0x1]
    %v1137 = vlaneseq
    %v1138 = vshrl.u32 %v1137, 7
    %v1139 = vsub.s32 0, %v1138
    %v1140 = vrot.slane %v1135, %v1139
    %v1143 = vsel %vm42, %v1127, 0
    %v1146 = vsel %vm42, %v1128, 0
    %v1149 = vsel %vm42, %v1129, 0
    %v1152 = vsel %vm42, %v1130, 0
    %1154 = vmatprep.subr.mxu0 0.0
    %1155 = vmatpush1.msra.mxu0 %v1131
    %1156 = vmatprep.subr.mxu0 0.0
    %1157 = vmatpush1.msra.mxu0 %v1132
    %1158 = vmatprep.subr.mxu0 0.0
    %1159 = vmatpush1.msra.mxu0 %v1133
    %1160 = vmatprep.subr.mxu0 0.0
    %1161 = vmatpush1.msra.mxu0 %v1134
    %1162 = vmatprep.subr.mxu0 0.0
    %1163 = vmatpush1.msra.mxu0 0.0
    %1164 = vmatprep.subr.mxu0 0.0
    %1165 = vmatpush1.msra.mxu0 0.0
    %1166 = vmatprep.subr.mxu0 0.0
    %1167 = vmatpush1.msra.mxu0 0.0
    %1168 = vmatprep.subr.mxu0 0.0
    %1169 = vmatpush1.msra.mxu0 0.0
    %1170 = vmatprep.subr.mxu0 0.0
    %1171 = vmatpush1.msra.mxu0 0.0
    %1172 = vmatprep.subr.mxu0 0.0
    %1173 = vmatpush1.msra.mxu0 0.0
    %1174 = vmatprep.subr.mxu0 0.0
    %1175 = vmatpush1.msra.mxu0 0.0
    %1176 = vmatprep.subr.mxu0 0.0
    %1177 = vmatpush1.msra.mxu0 0.0
    %1178 = vmatprep.subr.mxu0 0.0
    %1179 = vmatpush1.msra.mxu0 0.0
    %1180 = vmatprep.subr.mxu0 0.0
    %1181 = vmatpush1.msra.mxu0 0.0
    %1182 = vmatprep.subr.mxu0 0.0
    %1183 = vmatpush1.msra.mxu0 0.0
    %1184 = vmatprep.subr.mxu0 0.0
    %1185 = vmatpush1.msra.mxu0 0.0
    %1186 = vmatprep.subr.mxu0 0.0
    %1187 = vmatpush1.msra.mxu0 0.0
    %1188 = vmatprep.subr.mxu0 0.0
    %1189 = vmatpush1.msra.mxu0 0.0
    %1190 = vmatprep.subr.mxu0 0.0
    %1191 = vmatpush1.msra.mxu0 0.0
    %1192 = vmatprep.subr.mxu0 0.0
    %1193 = vmatpush1.msra.mxu0 0.0
    %1194 = vmatprep.subr.mxu0 0.0
    %1195 = vmatpush1.msra.mxu0 0.0
    %1196 = vmatprep.subr.mxu0 0.0
    %1197 = vmatpush1.msra.mxu0 0.0
    %1198 = vmatprep.subr.mxu0 0.0
    %1199 = vmatpush1.msra.mxu0 0.0
    %1200 = vmatprep.subr.mxu0 0.0
    %1201 = vmatpush1.msra.mxu0 0.0
    %1202 = vmatprep.subr.mxu0 0.0
    %1203 = vmatpush1.msra.mxu0 0.0
    %1204 = vmatprep.subr.mxu0 0.0
    %1205 = vmatpush1.msra.mxu0 0.0
    %1206 = vmatprep.subr.mxu0 0.0
    %1207 = vmatpush1.msra.mxu0 0.0
    %1208 = vmatprep.subr.mxu0 0.0
    %1209 = vmatpush1.msra.mxu0 0.0
    %1210 = vmatprep.subr.mxu0 0.0
    %1211 = vmatpush1.msra.mxu0 0.0
    %1212 = vmatprep.subr.mxu0 0.0
    %1213 = vmatpush1.msra.mxu0 0.0
    %1214 = vmatprep.subr.mxu0 0.0
    %1215 = vmatpush1.msra.mxu0 0.0
    %1216 = vmatprep.subr.mxu0 0.0
    %1217 = vmatpush1.msra.mxu0 0.0
    %1218 = vmatprep.mubr.f32.mxu0 0.0
    %1219 = vmatmul.mubr.f32.gmra.mrb[0].mxu0 %v1143
    %v1220 = vpop.f32.mrb[0].mxu0
    %v1221 = vadd.f32 %v1140, %v1220
    %v1222 = vpop.f32.mrb[0].mxu0
    %1223 = vmatprep.mubr.f32.mxu0 0.0
    %1224 = vmatmul.mubr.f32.gmra.mrb[0].mxu0 %v1146
    %v1225 = vpop.f32.mrb[0].mxu0
    %v1226 = vadd.f32 %v1140, %v1225
    %v1227 = vpop.f32.mrb[0].mxu0
    %1228 = vmatprep.mubr.f32.mxu0 0.0
    %1229 = vmatmul.mubr.f32.gmra.mrb[0].mxu0 %v1149
    %v1230 = vpop.f32.mrb[0].mxu0
    %v1231 = vadd.f32 %v1140, %v1230
    %v1232 = vpop.f32.mrb[0].mxu0
    %1233 = vmatprep.mubr.f32.mxu0 0.0
    %1234 = vmatmul.mubr.f32.gmra.mrb[0].mxu0 %v1152
    %v1235 = vpop.f32.mrb[0].mxu0
    %v1236 = vadd.f32 %v1140, %v1235
    %v1237 = vpop.f32.mrb[0].mxu0
    %1238 = vdwg.mxu0
    %v1239 = vmax.f32 %v1221, 0.0
    %v1240 = vmax.f32 %v1226, 0.0
    %v1241 = vmax.f32 %v1231, 0.0
    %v1242 = vmax.f32 %v1236, 0.0
    %v1243 = vld [vmem:[%s6] sm:$0xff]
    %v1244 = vld [vmem:[%s6 + $0x8] sm:$0xff]
    %v1245 = vld [vmem:[%s6 + $0x10] sm:$0xff]
    %v1246 = vld [vmem:[%s6 + $0x18] sm:$0xff]
    %v1247 = vld [vmem:[%s6 + $0x20] sm:$0xff]
    %v1248 = vld [vmem:[%s6 + $0x28] sm:$0xff]
    %v1249 = vld [vmem:[%s6 + $0x30] sm:$0xff]
    %v1250 = vld [vmem:[%s6 + $0x38] sm:$0xff]
    %v1251 = vld [vmem:[%s7 + $0x5] sm:$0x1]
    %v1252 = vlaneseq
    %v1253 = vshrl.u32 %v1252, 7
    %v1254 = vsub.s32 0, %v1253
    %v1255 = vrot.slane %v1251, %v1254
    %v1257 = vsel %vm792, %v1239, 0
    %v1260 = vsel %vm792, %v1240, 0
    %v1263 = vsel %vm792, %v1241, 0
    %v1266 = vsel %vm792, %v1242, 0
    %1268 = vmatprep.subr.mxu0 0.0
    %1269 = vmatpush1.msra.mxu0 %v1243
    %1270 = vmatprep.subr.mxu0 0.0
    %1271 = vmatpush1.msra.mxu0 %v1244
    %1272 = vmatprep.subr.mxu0 0.0
    %1273 = vmatpush1.msra.mxu0 %v1245
    %1274 = vmatprep.subr.mxu0 0.0
    %1275 = vmatpush1.msra.mxu0 %v1246
    %1276 = vmatprep.subr.mxu0 0.0
    %1277 = vmatpush1.msra.mxu0 %v1247
    %1278 = vmatprep.subr.mxu0 0.0
    %1279 = vmatpush1.msra.mxu0 %v1248
    %1280 = vmatprep.subr.mxu0 0.0
    %1281 = vmatpush1.msra.mxu0 %v1249
    %1282 = vmatprep.subr.mxu0 0.0
    %1283 = vmatpush1.msra.mxu0 %v1250
    %1284 = vmatprep.subr.mxu0 0.0
    %1285 = vmatpush1.msra.mxu0 0.0
    %1286 = vmatprep.subr.mxu0 0.0
    %1287 = vmatpush1.msra.mxu0 0.0
    %1288 = vmatprep.subr.mxu0 0.0
    %1289 = vmatpush1.msra.mxu0 0.0
    %1290 = vmatprep.subr.mxu0 0.0
    %1291 = vmatpush1.msra.mxu0 0.0
    %1292 = vmatprep.subr.mxu0 0.0
    %1293 = vmatpush1.msra.mxu0 0.0
    %1294 = vmatprep.subr.mxu0 0.0
    %1295 = vmatpush1.msra.mxu0 0.0
    %1296 = vmatprep.subr.mxu0 0.0
    %1297 = vmatpush1.msra.mxu0 0.0
    %1298 = vmatprep.subr.mxu0 0.0
    %1299 = vmatpush1.msra.mxu0 0.0
    %1300 = vmatprep.subr.mxu0 0.0
    %1301 = vmatpush1.msra.mxu0 0.0
    %1302 = vmatprep.subr.mxu0 0.0
    %1303 = vmatpush1.msra.mxu0 0.0
    %1304 = vmatprep.subr.mxu0 0.0
    %1305 = vmatpush1.msra.mxu0 0.0
    %1306 = vmatprep.subr.mxu0 0.0
    %1307 = vmatpush1.msra.mxu0 0.0
    %1308 = vmatprep.subr.mxu0 0.0
    %1309 = vmatpush1.msra.mxu0 0.0
    %1310 = vmatprep.subr.mxu0 0.0
    %1311 = vmatpush1.msra.mxu0 0.0
    %1312 = vmatprep.subr.mxu0 0.0
    %1313 = vmatpush1.msra.mxu0 0.0
    %1314 = vmatprep.subr.mxu0 0.0
    %1315 = vmatpush1.msra.mxu0 0.0
    %1316 = vmatprep.subr.mxu0 0.0
    %1317 = vmatpush1.msra.mxu0 0.0
    %1318 = vmatprep.subr.mxu0 0.0
    %1319 = vmatpush1.msra.mxu0 0.0
    %1320 = vmatprep.subr.mxu0 0.0
    %1321 = vmatpush1.msra.mxu0 0.0
    %1322 = vmatprep.subr.mxu0 0.0
    %1323 = vmatpush1.msra.mxu0 0.0
    %1324 = vmatprep.subr.mxu0 0.0
    %1325 = vmatpush1.msra.mxu0 0.0
    %1326 = vmatprep.subr.mxu0 0.0
    %1327 = vmatpush1.msra.mxu0 0.0
    %1328 = vmatprep.subr.mxu0 0.0
    %1329 = vmatpush1.msra.mxu0 0.0
    %1330 = vmatprep.subr.mxu0 0.0
    %1331 = vmatpush1.msra.mxu0 0.0
    %1332 = vmatprep.mubr.f32.mxu0 0.0
    %1333 = vmatmul.mubr.f32.gmra.mrb[0].mxu0 %v1257
    %v1334 = vpop.f32.mrb[0].mxu0
    %v1335 = vadd.f32 %v1255, %v1334
    %v1336 = vpop.f32.mrb[0].mxu0
    %1337 = vmatprep.mubr.f32.mxu0 0.0
    %1338 = vmatmul.mubr.f32.gmra.mrb[0].mxu0 %v1260
    %v1339 = vpop.f32.mrb[0].mxu0
    %v1340 = vadd.f32 %v1255, %v1339
    %v1341 = vpop.f32.mrb[0].mxu0
    %1342 = vmatprep.mubr.f32.mxu0 0.0
    %1343 = vmatmul.mubr.f32.gmra.mrb[0].mxu0 %v1263
    %v1344 = vpop.f32.mrb[0].mxu0
    %v1345 = vadd.f32 %v1255, %v1344
    %v1346 = vpop.f32.mrb[0].mxu0
    %1347 = vmatprep.mubr.f32.mxu0 0.0
    %1348 = vmatmul.mubr.f32.gmra.mrb[0].mxu0 %v1266
    %v1349 = vpop.f32.mrb[0].mxu0
    %v1350 = vadd.f32 %v1255, %v1349
    %v1351 = vpop.f32.mrb[0].mxu0
    %1352 = vdwg.mxu0
    %v1353 = vadd.f32 %v1057, %v1335
    %v1354 = vadd.f32 %v1058, %v1340
    %v1355 = vadd.f32 %v1059, %v1345
    %v1356 = vadd.f32 %v1060, %v1350
    %1357 = vst.msk [vmem:[#allocation2] sm:$0xff] %vm42, %v1353
    %1358 = vst.msk [vmem:[#allocation2 + $0x8] sm:$0xff] %vm42, %v1354
    %1359 = vst.msk [vmem:[#allocation2 + $0x10] sm:$0xff] %vm42, %v1355
    %1360 = vst.msk [vmem:[#allocation2 + $0x18] sm:$0xff] %vm42, %v1356
    // Predicated region
    $region42: #{tpu_custom_call.1} parent=1 // pred_check
      _
    $region43: #{tpu_custom_call.1} parent=1 // pred_check_branch
      %1362 = sbr.rel (0) target = $region45
    $region44: #{tpu_custom_call.1} parent=1 // pred_region
      %s1364 = ssub.s32 512, 512
      %1365 = vsyncadd [#allocation3], %s1364
      %s1366 = sshll.u32 [#allocation2], 4
      %s1367 = int_to_ptr.vmem [resolvable:$true] %s1366
      %1372 = dma.vmem_to_hbm [thread:$0]  %s1367, 512, %s10, [#allocation3], 128, 128, 8
    $region45: #{tpu_custom_call.1} parent=1 // pred_fallthru
      _
    // Predicated region
    $region46: #{tpu_custom_call.1} parent=1 // pred_check
      _
    $region47: #{tpu_custom_call.1} parent=1 // pred_check_branch
      %1374 = sbr.rel (0) target = $region49
    $region48: #{tpu_custom_call.1} parent=1 // pred_region
      %1375 = dma.done [#allocation3], 512
    $region49: #{tpu_custom_call.1} parent=1 // pred_fallthru
      _
    %1376 = vsyncpa [#allocation3], 1

</llo_original>
